<compile_context>
chip_gen: v5e
topology: v5e:2x2
jax: 0.10.0
libtpu: 0.0.40
codegen_flags: <defaults>
</compile_context>

<pallas_src>
import jax
import jax.numpy as jnp
from jax.experimental import pallas as pl
from jax.experimental.pallas import tpu as pltpu


def _simloss_kernel(s_ref, t_ref, mob_ref, out_ref, acc_ref, cmax_ref, csum_ref):
    p = pl.program_id(0)              # 0: column-statistics pass, 1: loss pass
    i = pl.program_id(1)              # row-tile index
    last_i = pl.num_programs(1) - 1

    @pl.when((p == 0) & (i == 0))
    def _init():
        acc_ref[...] = jnp.zeros_like(acc_ref)
        cmax_ref[...] = jnp.full_like(cmax_ref, -jnp.inf)
        csum_ref[...] = jnp.zeros_like(csum_ref)

    # ip[a, j] = sum_k t_tile[a, k] * s[j, k]  ==  (out2 @ out1.T) row tile.
    # NT contraction expressed directly; f32 accumulation on the MXU.
    ip = jax.lax.dot_general(
        t_ref[...], s_ref[...],
        dimension_numbers=(((1,), (1,)), ((), ())),
        preferred_element_type=jnp.float32,
        precision=jax.lax.Precision.HIGHEST,
    )                                                           # (TQ, N) f32

    @pl.when(p == 0)
    def _column_stats():
        # Online (flash-style) accumulation of per-column max and rescaled sum.
        tile_max = jnp.max(ip, axis=0, keepdims=True)           # (1, N)
        new_max = jnp.maximum(cmax_ref[...], tile_max)
        csum_ref[...] = (csum_ref[...] * jnp.exp(cmax_ref[...] - new_max)
                         + jnp.sum(jnp.exp(ip - new_max), axis=0, keepdims=True))
        cmax_ref[...] = new_max

    @pl.when(p == 1)
    def _loss():
        mob = mob_ref[...].astype(jnp.float32)                  # (TQ, N)

        # Row softmax (dim = -1): the full row of ip is present in this tile.
        rmax = jnp.max(ip, axis=-1, keepdims=True)              # (TQ, 1)
        e_row = jnp.exp(ip - rmax)
        p_row = e_row * pl.reciprocal(
            jnp.sum(e_row, axis=-1, keepdims=True), approx=False)

        # Column softmax (dim = 0) from the finalized pass-0 statistics.
        p_col = jnp.exp(ip - cmax_ref[...]) * pl.reciprocal(csum_ref[...],
                                                            approx=False)

        acc_ref[...] += jnp.sum(
            -mob * (jnp.log(p_row + 0.0001) + jnp.log(p_col + 0.0001)))

    @pl.when((p == 1) & (i == last_i))
    def _finalize():
        out_ref[...] = acc_ref[...]


def _choose_tile_rows(n, m, itemsize, budget_bytes=12 << 20):
    """Largest row tile (multiple of 8, divides N) that keeps streamed tiles +
    resident operands under the smallest scoped-VMEM default (v5e: 16 MiB)."""
    candidates = [tq for tq in (1024, 512, 256, 128, 64, 32, 16, 8) if n % tq == 0]
    if not candidates:
        return n                                   # full-array block is always legal
    resident = 2 * n * m * itemsize                # out1 (resident) + out2 tile bound
    for tq in candidates:
        streamed = 2 * tq * n * itemsize + 2 * tq * m * itemsize   # double-buffered
        live = 3 * tq * n * 4 + 2 * n * 4          # ip / exp temporaries + col stats
        if resident + streamed + live <= budget_bytes:
            return tq
    return candidates[-1]


def sim_loss(out1, out2, label, *, tile_rows=None):
    """Pallas implementation of SimLoss.forward(out1, out2, label) -> scalar."""
    n, m = out1.shape
    assert out2.shape == (n, m)
    assert label.shape == (n, n)

    tq = tile_rows if tile_rows is not None else _choose_tile_rows(
        n, m, jnp.dtype(out1.dtype).itemsize)
    assert n % tq == 0 and (tq % 8 == 0 or tq == n), (n, tq)
    num_tiles = n // tq

    result = pl.pallas_call(
        _simloss_kernel,
        out_shape=jax.ShapeDtypeStruct((1, 1), jnp.float32),
        grid_spec=pltpu.PrefetchScalarGridSpec(
            num_scalar_prefetch=0,
            grid=(2, num_tiles),                       # (pass, row tile) — pass outer
            in_specs=[
                # out1 (s): fully resident, DMA'd once (block index never changes).
                pl.BlockSpec((n, m), lambda p, i: (0, 0)),
                # out2 (t): streamed row tile.
                pl.BlockSpec((tq, m), lambda p, i: (i, 0)),
                # label: only advanced in pass 1 -> read from HBM exactly once.
                pl.BlockSpec((tq, n), lambda p, i: (i * p, 0)),
            ],
            out_specs=pl.BlockSpec((1, 1), lambda p, i: (0, 0)),
            scratch_shapes=[
                pltpu.VMEM((1, 1), jnp.float32),       # running loss
                pltpu.VMEM((1, n), jnp.float32),       # running column max
                pltpu.VMEM((1, n), jnp.float32),       # running column sum
            ],
        ),
        compiler_params=pltpu.CompilerParams(
            dimension_semantics=("arbitrary", "arbitrary"),
        ),
    )(out1, out2, label)
    return result[0, 0]


def _sim_loss_ref(out1, out2, label):
    """Pure-JAX reference mirroring the PyTorch code exactly."""
    def pip(mat_1, mat_2):
        return jnp.matmul(mat_2, mat_1.T, precision=jax.lax.Precision.HIGHEST)

    def one_side(s, t, mob):
        ip = pip(s, t)
        phat = jax.nn.softmax(ip, axis=-1)
        return jnp.sum(-mob * jnp.log(phat + 0.0001))

    return one_side(out1, out2, label) + one_side(out2, out1, label.T)


if __name__ == "__main__":
    key = jax.random.PRNGKey(0)

    # (N, M, explicit row tile or None).  The first case forces multiple row
    # tiles to exercise label streaming + online column statistics; the second
    # is the tiny single-tile path.
    cases = [(256, 64, 64), (16, 32, None)]

    for n, m, tq in cases:
        k1, k2, k3 = jax.random.split(jax.random.fold_in(key, n), 3)
        out1 = jax.random.normal(k1, (n, m), dtype=jnp.float32)
        out2 = jax.random.normal(k2, (n, m), dtype=jnp.float32)
        label = jax.random.uniform(k3, (n, n), dtype=jnp.float32)

        loss = jax.block_until_ready(sim_loss(out1, out2, label, tile_rows=tq))
        ref = jax.block_until_ready(_sim_loss_ref(out1, out2, label))

        assert jnp.allclose(loss, ref, rtol=2e-4, atol=1e-2), (n, m, loss, ref)

    print("KERNEL_OK")
</pallas_src>

<mosaic_0001>
module attributes {stable_mosaic.version = 11 : i64} {
  func.func @_simloss_kernel(%arg0: i32, %arg1: i32, %arg2: memref<256x64xf32, #tpu.memory_space<vmem>>, %arg3: memref<64x64xf32, #tpu.memory_space<vmem>>, %arg4: memref<64x256xf32, #tpu.memory_space<vmem>>, %arg5: memref<1x1xf32, #tpu.memory_space<vmem>>, %arg6: memref<1x1xf32, #tpu.memory_space<vmem>>, %arg7: memref<1x256xf32, #tpu.memory_space<vmem>>, %arg8: memref<1x256xf32, #tpu.memory_space<vmem>>) attributes {dimension_semantics = [#tpu.dimension_semantics<arbitrary>, #tpu.dimension_semantics<arbitrary>], iteration_bounds = array<i64: 2, 4>, scalar_prefetch = 0 : i64, scratch_operands = 3 : i64, tpu.core_type = #tpu.core_type<tc>, window_params = [{pipeline_mode = #tpu.pipeline_mode<synchronous>, transform_indices = @transform_0, window_bounds = array<i64: 256, 64>}, {transform_indices = @transform_1, window_bounds = array<i64: 64, 64>}, {transform_indices = @transform_2, window_bounds = array<i64: 64, 256>}, {pipeline_mode = #tpu.pipeline_mode<synchronous>, transform_indices = @transform_3, window_bounds = array<i64: 1, 1>}]} {
    %c0_i32 = arith.constant 0 : i32
    %0 = arith.cmpi eq, %arg0, %c0_i32 : i32
    %c0_i32_0 = arith.constant 0 : i32
    %1 = arith.cmpi eq, %arg1, %c0_i32_0 : i32
    %2 = arith.andi %0, %1 : i1
    %3 = arith.extui %2 : i1 to i32
    %c0_i32_1 = arith.constant 0 : i32
    %4 = arith.cmpi ne, %3, %c0_i32_1 : i32
    scf.if %4 {
      %cst_10 = arith.constant 0.000000e+00 : f32
      %19 = vector.broadcast %cst_10 : f32 to vector<1x1xf32>
      %c0_11 = arith.constant 0 : index
      %c0_12 = arith.constant 0 : index
      %20 = vector.load %arg6[%c0_11, %c0_12] : memref<1x1xf32, #tpu.memory_space<vmem>>, vector<1x1xf32>
      tpu.vector_store %arg6[%c0_11, %c0_12], %19 {strides = array<i32>} : memref<1x1xf32, #tpu.memory_space<vmem>>, vector<1x1xf32>,
      %cst_13 = arith.constant 0xFF800000 : f32
      %21 = vector.broadcast %cst_13 : f32 to vector<1x256xf32>
      %c0_14 = arith.constant 0 : index
      %c0_15 = arith.constant 0 : index
      %22 = vector.load %arg7[%c0_14, %c0_15] : memref<1x256xf32, #tpu.memory_space<vmem>>, vector<1x256xf32>
      tpu.vector_store %arg7[%c0_14, %c0_15], %21 {strides = array<i32>} : memref<1x256xf32, #tpu.memory_space<vmem>>, vector<1x256xf32>,
      %cst_16 = arith.constant 0.000000e+00 : f32
      %23 = vector.broadcast %cst_16 : f32 to vector<1x256xf32>
      %c0_17 = arith.constant 0 : index
      %c0_18 = arith.constant 0 : index
      %24 = vector.load %arg8[%c0_17, %c0_18] : memref<1x256xf32, #tpu.memory_space<vmem>>, vector<1x256xf32>
      tpu.vector_store %arg8[%c0_17, %c0_18], %23 {strides = array<i32>} : memref<1x256xf32, #tpu.memory_space<vmem>>, vector<1x256xf32>,
    } else {
    }
    %c0 = arith.constant 0 : index
    %c0_2 = arith.constant 0 : index
    %5 = vector.load %arg3[%c0, %c0_2] : memref<64x64xf32, #tpu.memory_space<vmem>>, vector<64x64xf32>
    %c0_3 = arith.constant 0 : index
    %c0_4 = arith.constant 0 : index
    %6 = vector.load %arg2[%c0_3, %c0_4] : memref<256x64xf32, #tpu.memory_space<vmem>>, vector<256x64xf32>
    %cst = arith.constant dense<0.000000e+00> : vector<64x256xf32>
    %7 = tpu.matmul %5, %6, %cst {dimension_numbers = #tpu.dot_dimension_numbers<[1], [1], [0], [0], [0, 0, 1, 0], [], []>, precision = #tpu.contract_precision<fp32>} : vector<64x64xf32>, vector<256x64xf32>, vector<64x256xf32> -> vector<64x256xf32>
    %c0_i32_5 = arith.constant 0 : i32
    %8 = arith.cmpi eq, %arg0, %c0_i32_5 : i32
    %9 = arith.extui %8 : i1 to i32
    %c0_i32_6 = arith.constant 0 : i32
    %10 = arith.cmpi ne, %9, %c0_i32_6 : i32
    scf.if %10 {
      %cst_10 = arith.constant dense<0xFF800000> : vector<256xf32>
      %19 = vector.multi_reduction <maximumf>, %7, %cst_10 [0] : vector<64x256xf32> to vector<256xf32>
      %20 = vector.shape_cast %19 : vector<256xf32> to vector<1x256xf32>
      %c0_11 = arith.constant 0 : index
      %c0_12 = arith.constant 0 : index
      %21 = vector.load %arg7[%c0_11, %c0_12] : memref<1x256xf32, #tpu.memory_space<vmem>>, vector<1x256xf32>
      %22 = arith.maximumf %21, %20 : vector<1x256xf32>
      %c0_13 = arith.constant 0 : index
      %c0_14 = arith.constant 0 : index
      %23 = vector.load %arg8[%c0_13, %c0_14] : memref<1x256xf32, #tpu.memory_space<vmem>>, vector<1x256xf32>
      %c0_15 = arith.constant 0 : index
      %c0_16 = arith.constant 0 : index
      %24 = vector.load %arg7[%c0_15, %c0_16] : memref<1x256xf32, #tpu.memory_space<vmem>>, vector<1x256xf32>
      %25 = arith.subf %24, %22 : vector<1x256xf32>
      %26 = math.exp %25 : vector<1x256xf32>
      %27 = arith.mulf %23, %26 : vector<1x256xf32>
      %28 = vector.broadcast %22 : vector<1x256xf32> to vector<64x256xf32>
      %29 = arith.subf %7, %28 : vector<64x256xf32>
      %30 = math.exp %29 : vector<64x256xf32>
      %cst_17 = arith.constant dense<0.000000e+00> : vector<256xf32>
      %31 = vector.multi_reduction <add>, %30, %cst_17 [0] : vector<64x256xf32> to vector<256xf32>
      %32 = vector.shape_cast %31 : vector<256xf32> to vector<1x256xf32>
      %33 = arith.addf %27, %32 : vector<1x256xf32>
      %c0_18 = arith.constant 0 : index
      %c0_19 = arith.constant 0 : index
      %34 = vector.load %arg8[%c0_18, %c0_19] : memref<1x256xf32, #tpu.memory_space<vmem>>, vector<1x256xf32>
      tpu.vector_store %arg8[%c0_18, %c0_19], %33 {strides = array<i32>} : memref<1x256xf32, #tpu.memory_space<vmem>>, vector<1x256xf32>,
      %c0_20 = arith.constant 0 : index
      %c0_21 = arith.constant 0 : index
      %35 = vector.load %arg7[%c0_20, %c0_21] : memref<1x256xf32, #tpu.memory_space<vmem>>, vector<1x256xf32>
      tpu.vector_store %arg7[%c0_20, %c0_21], %22 {strides = array<i32>} : memref<1x256xf32, #tpu.memory_space<vmem>>, vector<1x256xf32>,
    } else {
    }
    %c1_i32 = arith.constant 1 : i32
    %11 = arith.cmpi eq, %arg0, %c1_i32 : i32
    %12 = arith.extui %11 : i1 to i32
    %c0_i32_7 = arith.constant 0 : i32
    %13 = arith.cmpi ne, %12, %c0_i32_7 : i32
    scf.if %13 {
      %c0_10 = arith.constant 0 : index
      %c0_11 = arith.constant 0 : index
      %19 = vector.load %arg4[%c0_10, %c0_11] : memref<64x256xf32, #tpu.memory_space<vmem>>, vector<64x256xf32>
      %cst_12 = arith.constant dense<0xFF800000> : vector<64xf32>
      %20 = vector.multi_reduction <maximumf>, %7, %cst_12 [1] : vector<64x256xf32> to vector<64xf32>
      %21 = vector.shape_cast %20 : vector<64xf32> to vector<64x1xf32>
      %22 = vector.broadcast %21 : vector<64x1xf32> to vector<64x256xf32>
      %23 = arith.subf %7, %22 : vector<64x256xf32>
      %24 = math.exp %23 : vector<64x256xf32>
      %cst_13 = arith.constant dense<0.000000e+00> : vector<64xf32>
      %25 = vector.multi_reduction <add>, %24, %cst_13 [1] : vector<64x256xf32> to vector<64xf32>
      %26 = vector.shape_cast %25 : vector<64xf32> to vector<64x1xf32>
      %27 = tpu.reciprocal %26 : vector<64x1xf32> -> vector<64x1xf32>
      %28 = vector.broadcast %27 : vector<64x1xf32> to vector<64x256xf32>
      %29 = arith.mulf %24, %28 : vector<64x256xf32>
      %c0_14 = arith.constant 0 : index
      %c0_15 = arith.constant 0 : index
      %30 = vector.load %arg7[%c0_14, %c0_15] : memref<1x256xf32, #tpu.memory_space<vmem>>, vector<1x256xf32>
      %31 = vector.broadcast %30 : vector<1x256xf32> to vector<64x256xf32>
      %32 = arith.subf %7, %31 : vector<64x256xf32>
      %33 = math.exp %32 : vector<64x256xf32>
      %c0_16 = arith.constant 0 : index
      %c0_17 = arith.constant 0 : index
      %34 = vector.load %arg8[%c0_16, %c0_17] : memref<1x256xf32, #tpu.memory_space<vmem>>, vector<1x256xf32>
      %35 = tpu.reciprocal %34 : vector<1x256xf32> -> vector<1x256xf32>
      %36 = vector.broadcast %35 : vector<1x256xf32> to vector<64x256xf32>
      %37 = arith.mulf %33, %36 : vector<64x256xf32>
      %c0_18 = arith.constant 0 : index
      %c0_19 = arith.constant 0 : index
      %38 = vector.load %arg6[%c0_18, %c0_19] : memref<1x1xf32, #tpu.memory_space<vmem>>, vector<1x1xf32>
      %cst_20 = arith.constant 0.000000e+00 : f32
      %39 = vector.broadcast %cst_20 : f32 to vector<64x256xf32>
      %40 = arith.subf %39, %19 : vector<64x256xf32>
      %cst_21 = arith.constant 9.99999974E-5 : f32
      %41 = vector.broadcast %cst_21 : f32 to vector<64x256xf32>
      %42 = arith.addf %29, %41 : vector<64x256xf32>
      %43 = math.log %42 : vector<64x256xf32>
      %cst_22 = arith.constant 9.99999974E-5 : f32
      %44 = vector.broadcast %cst_22 : f32 to vector<64x256xf32>
      %45 = arith.addf %37, %44 : vector<64x256xf32>
      %46 = math.log %45 : vector<64x256xf32>
      %47 = arith.addf %43, %46 : vector<64x256xf32>
      %48 = arith.mulf %40, %47 : vector<64x256xf32>
      %49 = vector.shape_cast %48 : vector<64x256xf32> to vector<1x64x256xf32>
      %cst_23 = arith.constant dense<0.000000e+00> : vector<1xf32>
      %50 = vector.multi_reduction <add>, %49, %cst_23 [1, 2] : vector<1x64x256xf32> to vector<1xf32>
      %51 = vector.shape_cast %50 : vector<1xf32> to vector<1x1x1xf32>
      %52 = vector.extract %51[0, 0, 0] : f32 from vector<1x1x1xf32>
      %53 = vector.broadcast %52 : f32 to vector<1x1xf32>
      %54 = arith.addf %38, %53 : vector<1x1xf32>
      %c0_24 = arith.constant 0 : index
      %c0_25 = arith.constant 0 : index
      %55 = vector.load %arg6[%c0_24, %c0_25] : memref<1x1xf32, #tpu.memory_space<vmem>>, vector<1x1xf32>
      tpu.vector_store %arg6[%c0_24, %c0_25], %54 {strides = array<i32>} : memref<1x1xf32, #tpu.memory_space<vmem>>, vector<1x1xf32>,
    } else {
    }
    %c1_i32_8 = arith.constant 1 : i32
    %14 = arith.cmpi eq, %arg0, %c1_i32_8 : i32
    %c3_i32 = arith.constant 3 : i32
    %15 = arith.cmpi eq, %arg1, %c3_i32 : i32
    %16 = arith.andi %14, %15 : i1
    %17 = arith.extui %16 : i1 to i32
    %c0_i32_9 = arith.constant 0 : i32
    %18 = arith.cmpi ne, %17, %c0_i32_9 : i32
    scf.if %18 {
      %c0_10 = arith.constant 0 : index
      %c0_11 = arith.constant 0 : index
      %19 = vector.load %arg6[%c0_10, %c0_11] : memref<1x1xf32, #tpu.memory_space<vmem>>, vector<1x1xf32>
      %c0_12 = arith.constant 0 : index
      %c0_13 = arith.constant 0 : index
      %20 = vector.load %arg5[%c0_12, %c0_13] : memref<1x1xf32, #tpu.memory_space<vmem>>, vector<1x1xf32>
      tpu.vector_store %arg5[%c0_12, %c0_13], %19 {strides = array<i32>} : memref<1x1xf32, #tpu.memory_space<vmem>>, vector<1x1xf32>,
    } else {
    }
    return
  }
  func.func @transform_0(%arg0: i32, %arg1: i32) -> (i32, i32) {
    %c0_i32 = arith.constant 0 : i32
    %c0_i32_0 = arith.constant 0 : i32
    %c0_i32_1 = arith.constant 0 : i32
    return %c0_i32, %c0_i32_0 : i32, i32
  }
  func.func @transform_1(%arg0: i32, %arg1: i32) -> (i32, i32) {
    %c0_i32 = arith.constant 0 : i32
    %c0_i32_0 = arith.constant 0 : i32
    return %arg1, %c0_i32 : i32, i32
  }
  func.func @transform_2(%arg0: i32, %arg1: i32) -> (i32, i32) {
    %0 = arith.muli %arg1, %arg0 : i32
    %c0_i32 = arith.constant 0 : i32
    %c0_i32_0 = arith.constant 0 : i32
    return %0, %c0_i32 : i32, i32
  }
  func.func @transform_3(%arg0: i32, %arg1: i32) -> (i32, i32) {
    %c0_i32 = arith.constant 0 : i32
    %c0_i32_0 = arith.constant 0 : i32
    %c0_i32_1 = arith.constant 0 : i32
    return %c0_i32, %c0_i32_0 : i32, i32
  }
}

</mosaic_0001>

<llo_original>
// kernel: tpu_custom_call.1
$region0: #{tpu_custom_call.1}
  #allocation0 [shape = 'u32[]', space=smem, size = 0x4, offset = 0x4, fixed_abs, tag = 'smem constant byte address 0x4 - core index']
  #allocation1 [shape = 'u32[72,128]{1,0:T(1,128)}', space=vmem, size = 0x9000, scoped, tag = 'internal scratch']
  #allocation2 [shape = 'f32[1,1]{1,0:T(1,128)}', space=vmem, size = 0x200, scoped, tag = 'scratch operand']
  #allocation3 [shape = 'f32[1,256]{1,0:T(1,128)}', space=vmem, size = 0x400, scoped, tag = 'scratch operand']
  #allocation4 [shape = 'f32[1,256]{1,0:T(1,128)}', space=vmem, size = 0x400, scoped, tag = 'scratch operand']
  %s0 = inlined_call_operand.vmem [shape: f32[256,64], index: 0, kind: input, shape index: {}]
  %s1 = inlined_call_operand.vmem [shape: f32[256,64], index: 1, kind: input, shape index: {}]
  %s2 = inlined_call_operand.vmem [shape: f32[256,256], index: 2, kind: input, shape index: {}]
  %s3 = inlined_call_operand.hbm [shape: f32[1,1], index: 3, kind: output, shape index: {}]
  %s4 = sld [smem:[#allocation0]]
  $region61: #{tpu_custom_call.1} parent=0
    _
  %s6 = ssub.s32 1, %s4
  %s7 = scalar_select 0, %s6, %s4
  $region1: #{tpu_custom_call.1} parent=0
    #allocation5 [shape = 'u8[512]{0}', space=vmem, size = 0x400, scoped, tag = 'output window, operand 0, single buffered']
    #allocation6 [shape = 's32[2]{0}', space=sflag, size = 0x8, scoped, tag = 'scoped memory for tpu_custom_call.1']
    %8 = vsyncpa [#allocation6], 0
    loop: start=0, step=1, limit=10
    $region2: #{tpu_custom_call.1} parent=1 // loop_pre_header
      _
    $region3: #{tpu_custom_call.1} parent=1 // loop_header
      %s10 = sphi 0, %s14
      %p11 = scmp.ge.s32.totalorder %s10, 10
      %s17 = sphi 0, %s29
      %s18 = sphi 0, %s25
      %s19 = sphi 0, %s17
      %s20 = sphi 0, %s18
      %s21 = sphi 0, %s19
      %s22 = sphi 0, %s20
      %s30 = sphi 0, %s30
      %s32 = sphi 0, %s30
      %s33 = sphi 0, %s32
      %s47 = sphi 0, %s33
      %s53 = sphi 0, %s55
      %s56 = sphi 0, %s53
      %s57 = sphi 0, %s56
      %s73 = sphi 0, %s57
      %s81 = sphi 0, %s83
      %s84 = sphi 0, %s81
      %s85 = sphi 0, %s84
      %s101 = sphi 0, %s85
      %s105 = sphi 0, %s105
      %s107 = sphi 0, %s105
      %s108 = sphi 0, %s107
      %s122 = sphi 0, %s108
    $region4: #{tpu_custom_call.1} parent=1 // loop_header_branch
      %13 = sbr.rel (%p11) target = $region8
    $region5: #{tpu_custom_call.1} parent=1 // loop_body
      %s15 = ssub.s32 %s10, 1
      %s16 = ssub.s32 %s10, 2
      %s23 = sadd.s32 1, %s18
      %p24 = scmp.ge.s32.totalorder %s23, 4
      %s25 = scalar_select %p24, 0, %s23
      %s26 = sadd.s32 1, %s17
      %s27 = scalar_select %p24, %s26, %s17
      %p28 = scmp.ge.s32.totalorder %s27, 2
      %s29 = scalar_select %p28, 0, %s27
      %s31 = sadd.s32 %s30, 1
      %p34 = scmp.eq.s32.totalorder %s10, 7
      %p35 = scmp.ne.s32.totalorder %s30, %s32
      %p36 = scmp.eq.s32.totalorder %s10, 0
      %p37 = por %p35, %p36
      %p38 = scmp.ne.s32.totalorder %s30, %s32
      %p39 = scmp.eq.s32.totalorder %s15, 7
      %p40 = por %p38, %p39
      %p41 = scmp.ne.s32.totalorder %s32, %s33
      %p42 = scmp.eq.s32.totalorder %s15, 0
      %p43 = por %p41, %p42
      %p44 = scmp.ne.s32.totalorder %s32, %s33
      %p45 = scmp.eq.s32.totalorder %s16, 7
      %p46 = por %p44, %p45
      %p48 = scmp.ne.s32.totalorder %s33, %s47
      %p49 = scmp.eq.s32.totalorder %s16, 0
      %p50 = por %p48, %p49
      %s51 = ssub.s32 %s18, %s25
      %p52 = scmp.eq.s32.totalorder %s51, 0
      %s54 = sadd.s32 %s53, 1
      %s55 = scalar_select %p52, %s53, %s54
      %p58 = pneg %p52
      %p59 = scmp.eq.s32.totalorder %s10, 7
      %p60 = por %p58, %p59
      %p61 = scmp.ne.s32.totalorder %s53, %s56
      %p62 = scmp.eq.s32.totalorder %s10, 0
      %p63 = por %p61, %p62
      %p64 = scmp.ne.s32.totalorder %s53, %s56
      %p65 = scmp.eq.s32.totalorder %s15, 7
      %p66 = por %p64, %p65
      %p67 = scmp.ne.s32.totalorder %s56, %s57
      %p68 = scmp.eq.s32.totalorder %s15, 0
      %p69 = por %p67, %p68
      %p70 = scmp.ne.s32.totalorder %s56, %s57
      %p71 = scmp.eq.s32.totalorder %s16, 7
      %p72 = por %p70, %p71
      %p74 = scmp.ne.s32.totalorder %s57, %s73
      %p75 = scmp.eq.s32.totalorder %s16, 0
      %p76 = por %p74, %p75
      %s77 = smul.u32 %s18, %s17
      %s78 = smul.u32 %s25, %s29
      %s79 = ssub.s32 %s77, %s78
      %p80 = scmp.eq.s32.totalorder %s79, 0
      %s82 = sadd.s32 %s81, 1
      %s83 = scalar_select %p80, %s81, %s82
      %p86 = pneg %p80
      %p87 = scmp.eq.s32.totalorder %s10, 7
      %p88 = por %p86, %p87
      %p89 = scmp.ne.s32.totalorder %s81, %s84
      %p90 = scmp.eq.s32.totalorder %s10, 0
      %p91 = por %p89, %p90
      %p92 = scmp.ne.s32.totalorder %s81, %s84
      %p93 = scmp.eq.s32.totalorder %s15, 7
      %p94 = por %p92, %p93
      %p95 = scmp.ne.s32.totalorder %s84, %s85
      %p96 = scmp.eq.s32.totalorder %s15, 0
      %p97 = por %p95, %p96
      %p98 = scmp.ne.s32.totalorder %s84, %s85
      %p99 = scmp.eq.s32.totalorder %s16, 7
      %p100 = por %p98, %p99
      %p102 = scmp.ne.s32.totalorder %s85, %s101
      %p103 = scmp.eq.s32.totalorder %s16, 0
      %p104 = por %p102, %p103
      %s106 = sadd.s32 %s105, 1
      %p109 = scmp.eq.s32.totalorder %s10, 7
      %p110 = scmp.ne.s32.totalorder %s105, %s107
      %p111 = scmp.eq.s32.totalorder %s10, 0
      %p112 = por %p110, %p111
      %p113 = scmp.ne.s32.totalorder %s105, %s107
      %p114 = scmp.eq.s32.totalorder %s15, 7
      %p115 = por %p113, %p114
      %p116 = scmp.ne.s32.totalorder %s107, %s108
      %p117 = scmp.eq.s32.totalorder %s15, 0
      %p118 = por %p116, %p117
      %p119 = scmp.ne.s32.totalorder %s107, %s108
      %p120 = scmp.eq.s32.totalorder %s16, 7
      %p121 = por %p119, %p120
      %p123 = scmp.ne.s32.totalorder %s108, %s122
      %p124 = scmp.eq.s32.totalorder %s16, 0
      %p125 = por %p123, %p124
      %p126 = scmp.le.s32.totalorder 1, %s10
      %p127 = scmp.lt.s32.totalorder %s10, 9
      %p128 = pnand %p126, %p127
      %p129 = pneg %p128
      // Predicated region
      $region9: #{tpu_custom_call.1} parent=5 // pred_check
        _
      $region10: #{tpu_custom_call.1} parent=5 // pred_check_branch
        %131 = sbr.rel (%p128) target = $region12
      $region11: #{tpu_custom_call.1} parent=5 // pred_region
        %s132 = ssub.s32 %s10, 1
        // Predicated region
        $region13: #{tpu_custom_call.1} parent=11 // pred_check
          %p133 = pneg %p43
        $region14: #{tpu_custom_call.1} parent=11 // pred_check_branch
          %135 = sbr.rel (%p133) target = $region16
        $region15: #{tpu_custom_call.1} parent=11 // pred_region
          _
        $region16: #{tpu_custom_call.1} parent=11 // pred_fallthru
          _
      $region12: #{tpu_custom_call.1} parent=5 // pred_fallthru
        _
      %p136 = scmp.lt.s32.totalorder %s10, 8
      // Predicated region
      $region17: #{tpu_custom_call.1} parent=5 // pred_check
        %p137 = pneg %p136
      $region18: #{tpu_custom_call.1} parent=5 // pred_check_branch
        %139 = sbr.rel (%p137) target = $region20
      $region19: #{tpu_custom_call.1} parent=5 // pred_region
        // Predicated region
        $region21: #{tpu_custom_call.1} parent=19 // pred_check
          %p140 = pneg %p63
        $region22: #{tpu_custom_call.1} parent=19 // pred_check_branch
          %142 = sbr.rel (%p140) target = $region24
        $region23: #{tpu_custom_call.1} parent=19 // pred_region
          %s143 = smul.u32 8, %s18
          %p144 = scmp.lt.s32.totalorder %s143, 31
          %s145 = scalar_select %p144, %s143, 31
          %s146 = smul.addr %s145, 8
          %s147 = scalar_lea.vmem %s1, %s146
          %s148 = smul.u32 8, %s18
        $region24: #{tpu_custom_call.1} parent=19 // pred_fallthru
          _
        // Predicated region
        $region25: #{tpu_custom_call.1} parent=19 // pred_check
          %p149 = pneg %p91
        $region26: #{tpu_custom_call.1} parent=19 // pred_check_branch
          %151 = sbr.rel (%p149) target = $region28
        $region27: #{tpu_custom_call.1} parent=19 // pred_region
          %s152 = smul.u32 %s18, %s17
          %s153 = smul.u32 8, %s152
          %p154 = scmp.lt.s32.totalorder %s153, 31
          %s155 = scalar_select %p154, %s153, 31
          %s156 = smul.addr %s155, 2
          %s157 = smul.addr %s156, 8
          %s158 = scalar_lea.vmem %s2, %s157
          %s159 = smul.u32 %s18, %s17
          %s160 = smul.u32 8, %s159
        $region28: #{tpu_custom_call.1} parent=19 // pred_fallthru
          _
      $region20: #{tpu_custom_call.1} parent=5 // pred_fallthru
        _
      %p161 = scmp.le.s32.totalorder 1, %s10
      %p162 = scmp.lt.s32.totalorder %s10, 9
      %p163 = pnand %p161, %p162
      %p164 = pneg %p163
      // Predicated region
      $region29: #{tpu_custom_call.1} parent=5 // pred_check
        _
      $region30: #{tpu_custom_call.1} parent=5 // pred_check_branch
        %166 = sbr.rel (%p163) target = $region32
      $region31: #{tpu_custom_call.1} parent=5 // pred_region
        %s167 = ssub.s32 %s10, 1
        %p168 = pneg %p43
        %p169 = pneg %p40
        %s170 = smul.u32 8, %s20
        %p171 = scmp.lt.s32.totalorder %s170, 31
        %s172 = scalar_select %p171, %s170, 31
        %s173 = smul.addr %s172, 8
        %s174 = scalar_lea.vmem %s1, %s173
        %p175 = pneg %p69
        %p176 = pneg %p66
        %s177 = smul.u32 %s20, %s19
        %s178 = smul.u32 8, %s177
        %p179 = scmp.lt.s32.totalorder %s178, 31
        %s180 = scalar_select %p179, %s178, 31
        %s181 = smul.addr %s180, 2
        %s182 = smul.addr %s181, 8
        %s183 = scalar_lea.vmem %s2, %s182
        %p184 = pneg %p97
        %p185 = pneg %p94
        %p186 = pneg %p118
        %p187 = pneg %p115
        %s188 = smul.u32 8, %s20
        %p189 = scmp.lt.s32.totalorder %s188, 31
        %s190 = scalar_select %p189, %s188, 31
        %s191 = smul.addr %s190, 8
        %s192 = scalar_lea.vmem %s1, %s191
        %s193 = smul.u32 8, %s20
        %s194 = smul.u32 %s20, %s19
        %s195 = smul.u32 8, %s194
        %p196 = scmp.lt.s32.totalorder %s195, 31
        %s197 = scalar_select %p196, %s195, 31
        %s198 = smul.addr %s197, 2
        %s199 = smul.addr %s198, 8
        %s200 = scalar_lea.vmem %s2, %s199
        %s201 = smul.u32 %s20, %s19
        %s202 = smul.u32 8, %s201
        %p203 = scmp.eq.s32.totalorder %s19, 0
        %p204 = scmp.eq.s32.totalorder %s20, 0
        %p205 = pnand %p203, %p204
        %p206 = pneg %p205
        // Predicated region
        $region33: #{tpu_custom_call.1} parent=31 // pred_check
          _
        $region34: #{tpu_custom_call.1} parent=31 // pred_check_branch
          %208 = sbr.rel (%p205) target = $region36
        $region35: #{tpu_custom_call.1} parent=31 // pred_region
          %vm209 = vcmask 0
          %210 = vst.msk [vmem:[#allocation2] sm:$0x1] %vm209, 0.0
          %v211 = vlaneseq
          %vm212 = vcmp.ge.s32.totalorder %v211, 0
          %vm213 = vcmp.lt.s32.totalorder %v211, 256
          %vm214 = vmand %vm212, %vm213
          %215 = vst.msk [vmem:[#allocation3] sm:$0x3] %vm214, -inf
          %216 = vst.msk [vmem:[#allocation4] sm:$0x3] %vm214, 0.0
        $region36: #{tpu_custom_call.1} parent=31 // pred_fallthru
          _
        %v217 = vld [vmem:[%s192] sm:$0xff]
        %v218 = vld [vmem:[%s192 + $0x8] sm:$0xff]
        %v219 = vld [vmem:[%s192 + $0x10] sm:$0xff]
        %v220 = vld [vmem:[%s192 + $0x18] sm:$0xff]
        %v221 = vld [vmem:[%s192 + $0x20] sm:$0xff]
        %v222 = vld [vmem:[%s192 + $0x28] sm:$0xff]
        %v223 = vld [vmem:[%s192 + $0x30] sm:$0xff]
        %v224 = vld [vmem:[%s192 + $0x38] sm:$0xff]
        %v225 = vld [vmem:[%s0] sm:$0xff]
        %v226 = vld [vmem:[%s0 + $0x8] sm:$0xff]
        %v227 = vld [vmem:[%s0 + $0x10] sm:$0xff]
        %v228 = vld [vmem:[%s0 + $0x18] sm:$0xff]
        %v229 = vld [vmem:[%s0 + $0x20] sm:$0xff]
        %v230 = vld [vmem:[%s0 + $0x28] sm:$0xff]
        %v231 = vld [vmem:[%s0 + $0x30] sm:$0xff]
        %v232 = vld [vmem:[%s0 + $0x38] sm:$0xff]
        %v233 = vld [vmem:[%s0 + $0x40] sm:$0xff]
        %v234 = vld [vmem:[%s0 + $0x48] sm:$0xff]
        %v235 = vld [vmem:[%s0 + $0x50] sm:$0xff]
        %v236 = vld [vmem:[%s0 + $0x58] sm:$0xff]
        %v237 = vld [vmem:[%s0 + $0x60] sm:$0xff]
        %v238 = vld [vmem:[%s0 + $0x68] sm:$0xff]
        %v239 = vld [vmem:[%s0 + $0x70] sm:$0xff]
        %v240 = vld [vmem:[%s0 + $0x78] sm:$0xff]
        %v241 = vld [vmem:[%s0 + $0x80] sm:$0xff]
        %v242 = vld [vmem:[%s0 + $0x88] sm:$0xff]
        %v243 = vld [vmem:[%s0 + $0x90] sm:$0xff]
        %v244 = vld [vmem:[%s0 + $0x98] sm:$0xff]
        %v245 = vld [vmem:[%s0 + $0xa0] sm:$0xff]
        %v246 = vld [vmem:[%s0 + $0xa8] sm:$0xff]
        %v247 = vld [vmem:[%s0 + $0xb0] sm:$0xff]
        %v248 = vld [vmem:[%s0 + $0xb8] sm:$0xff]
        %v249 = vld [vmem:[%s0 + $0xc0] sm:$0xff]
        %v250 = vld [vmem:[%s0 + $0xc8] sm:$0xff]
        %v251 = vld [vmem:[%s0 + $0xd0] sm:$0xff]
        %v252 = vld [vmem:[%s0 + $0xd8] sm:$0xff]
        %v253 = vld [vmem:[%s0 + $0xe0] sm:$0xff]
        %v254 = vld [vmem:[%s0 + $0xe8] sm:$0xff]
        %v255 = vld [vmem:[%s0 + $0xf0] sm:$0xff]
        %v256 = vld [vmem:[%s0 + $0xf8] sm:$0xff]
        %vm257 = vcmask 523264
        %v259 = vsel %vm257, %v217, 0
        %v262 = vsel %vm257, %v218, 0
        %v265 = vsel %vm257, %v219, 0
        %v268 = vsel %vm257, %v220, 0
        %v271 = vsel %vm257, %v221, 0
        %v274 = vsel %vm257, %v222, 0
        %v277 = vsel %vm257, %v223, 0
        %v280 = vsel %vm257, %v224, 0
        %v283 = vsel %vm257, %v225, 0
        %v286 = vsel %vm257, %v226, 0
        %v289 = vsel %vm257, %v227, 0
        %v292 = vsel %vm257, %v228, 0
        %v295 = vsel %vm257, %v229, 0
        %v298 = vsel %vm257, %v230, 0
        %v301 = vsel %vm257, %v231, 0
        %v304 = vsel %vm257, %v232, 0
        %v307 = vsel %vm257, %v233, 0
        %v310 = vsel %vm257, %v234, 0
        %v313 = vsel %vm257, %v235, 0
        %v316 = vsel %vm257, %v236, 0
        %v319 = vsel %vm257, %v237, 0
        %v322 = vsel %vm257, %v238, 0
        %v325 = vsel %vm257, %v239, 0
        %v328 = vsel %vm257, %v240, 0
        %v331 = vsel %vm257, %v241, 0
        %v334 = vsel %vm257, %v242, 0
        %v337 = vsel %vm257, %v243, 0
        %v340 = vsel %vm257, %v244, 0
        %v343 = vsel %vm257, %v245, 0
        %v346 = vsel %vm257, %v246, 0
        %v349 = vsel %vm257, %v247, 0
        %v352 = vsel %vm257, %v248, 0
        %v355 = vsel %vm257, %v249, 0
        %v358 = vsel %vm257, %v250, 0
        %v361 = vsel %vm257, %v251, 0
        %v364 = vsel %vm257, %v252, 0
        %v367 = vsel %vm257, %v253, 0
        %v370 = vsel %vm257, %v254, 0
        %v373 = vsel %vm257, %v255, 0
        %v376 = vsel %vm257, %v256, 0
        %v378 = vand.u32 %v328, 4294901760
        %379 = vmatpush.xpose.msra.mxu0 %v378
        %v380 = vand.u32 %v325, 4294901760
        %381 = vmatpush.xpose.msra.mxu0 %v380
        %v382 = vand.u32 %v322, 4294901760
        %383 = vmatpush.xpose.msra.mxu0 %v382
        %v384 = vand.u32 %v319, 4294901760
        %385 = vmatpush.xpose.msra.mxu0 %v384
        %v386 = vand.u32 %v316, 4294901760
        %387 = vmatpush.xpose.msra.mxu0 %v386
        %v388 = vand.u32 %v313, 4294901760
        %389 = vmatpush.xpose.msra.mxu0 %v388
        %v390 = vand.u32 %v310, 4294901760
        %391 = vmatpush.xpose.msra.mxu0 %v390
        %v392 = vand.u32 %v307, 4294901760
        %393 = vmatpush.xpose.msra.mxu0 %v392
        %v394 = vand.u32 %v304, 4294901760
        %395 = vmatpush.xpose.msra.mxu0 %v394
        %v396 = vand.u32 %v301, 4294901760
        %397 = vmatpush.xpose.msra.mxu0 %v396
        %v398 = vand.u32 %v298, 4294901760
        %399 = vmatpush.xpose.msra.mxu0 %v398
        %v400 = vand.u32 %v295, 4294901760
        %401 = vmatpush.xpose.msra.mxu0 %v400
        %v402 = vand.u32 %v292, 4294901760
        %403 = vmatpush.xpose.msra.mxu0 %v402
        %v404 = vand.u32 %v289, 4294901760
        %405 = vmatpush.xpose.msra.mxu0 %v404
        %v406 = vand.u32 %v286, 4294901760
        %407 = vmatpush.xpose.msra.mxu0 %v406
        %v408 = vand.u32 %v283, 4294901760
        %409 = vmatpush.xpose.msra.mxu0 %v408
        %v410 = vand.u32 %v259, 4294901760
        %v411 = vsub.f32 %v259, %v410
        %v412 = vand.u32 %v411, 4294901760
        %v413 = vsub.f32 %v411, %v412
        %v414 = vand.u32 %v413, 4294901760
        %415 = vmatmul.f32.gmra.mxu0 %v414
        %v416 = vpop.f32.mrf.mxu0
        %v417 = vadd.f32 0.0, %v416
        %v418 = vand.u32 %v262, 4294901760
        %v419 = vsub.f32 %v262, %v418
        %v420 = vand.u32 %v419, 4294901760
        %v421 = vsub.f32 %v419, %v420
        %v422 = vand.u32 %v421, 4294901760
        %423 = vmatmul.f32.gmra.mxu0 %v422
        %v424 = vpop.f32.mrf.mxu0
        %v425 = vadd.f32 0.0, %v424
        %v426 = vand.u32 %v265, 4294901760
        %v427 = vsub.f32 %v265, %v426
        %v428 = vand.u32 %v427, 4294901760
        %v429 = vsub.f32 %v427, %v428
        %v430 = vand.u32 %v429, 4294901760
        %431 = vmatmul.f32.gmra.mxu0 %v430
        %v432 = vpop.f32.mrf.mxu0
        %v433 = vadd.f32 0.0, %v432
        %v434 = vand.u32 %v268, 4294901760
        %v435 = vsub.f32 %v268, %v434
        %v436 = vand.u32 %v435, 4294901760
        %v437 = vsub.f32 %v435, %v436
        %v438 = vand.u32 %v437, 4294901760
        %439 = vmatmul.f32.gmra.mxu0 %v438
        %v440 = vpop.f32.mrf.mxu0
        %v441 = vadd.f32 0.0, %v440
        %v442 = vand.u32 %v271, 4294901760
        %v443 = vsub.f32 %v271, %v442
        %v444 = vand.u32 %v443, 4294901760
        %v445 = vsub.f32 %v443, %v444
        %v446 = vand.u32 %v445, 4294901760
        %447 = vmatmul.f32.gmra.mxu0 %v446
        %v448 = vpop.f32.mrf.mxu0
        %v449 = vadd.f32 0.0, %v448
        %v450 = vand.u32 %v274, 4294901760
        %v451 = vsub.f32 %v274, %v450
        %v452 = vand.u32 %v451, 4294901760
        %v453 = vsub.f32 %v451, %v452
        %v454 = vand.u32 %v453, 4294901760
        %455 = vmatmul.f32.gmra.mxu0 %v454
        %v456 = vpop.f32.mrf.mxu0
        %v457 = vadd.f32 0.0, %v456
        %v458 = vand.u32 %v277, 4294901760
        %v459 = vsub.f32 %v277, %v458
        %v460 = vand.u32 %v459, 4294901760
        %v461 = vsub.f32 %v459, %v460
        %v462 = vand.u32 %v461, 4294901760
        %463 = vmatmul.f32.gmra.mxu0 %v462
        %v464 = vpop.f32.mrf.mxu0
        %v465 = vadd.f32 0.0, %v464
        %v466 = vand.u32 %v280, 4294901760
        %v467 = vsub.f32 %v280, %v466
        %v468 = vand.u32 %v467, 4294901760
        %v469 = vsub.f32 %v467, %v468
        %v470 = vand.u32 %v469, 4294901760
        %471 = vmatmul.f32.gmra.mxu0 %v470
        %v472 = vpop.f32.mrf.mxu0
        %v473 = vadd.f32 0.0, %v472
        %474 = vdwg.mxu0
        %v475 = vand.u32 %v328, 4294901760
        %v476 = vsub.f32 %v328, %v475
        %v477 = vand.u32 %v476, 4294901760
        %v478 = vsub.f32 %v476, %v477
        %v479 = vand.u32 %v478, 4294901760
        %480 = vmatpush.xpose.msra.mxu0 %v479
        %v481 = vand.u32 %v325, 4294901760
        %v482 = vsub.f32 %v325, %v481
        %v483 = vand.u32 %v482, 4294901760
        %v484 = vsub.f32 %v482, %v483
        %v485 = vand.u32 %v484, 4294901760
        %486 = vmatpush.xpose.msra.mxu0 %v485
        %v487 = vand.u32 %v322, 4294901760
        %v488 = vsub.f32 %v322, %v487
        %v489 = vand.u32 %v488, 4294901760
        %v490 = vsub.f32 %v488, %v489
        %v491 = vand.u32 %v490, 4294901760
        %492 = vmatpush.xpose.msra.mxu0 %v491
        %v493 = vand.u32 %v319, 4294901760
        %v494 = vsub.f32 %v319, %v493
        %v495 = vand.u32 %v494, 4294901760
        %v496 = vsub.f32 %v494, %v495
        %v497 = vand.u32 %v496, 4294901760
        %498 = vmatpush.xpose.msra.mxu0 %v497
        %v499 = vand.u32 %v316, 4294901760
        %v500 = vsub.f32 %v316, %v499
        %v501 = vand.u32 %v500, 4294901760
        %v502 = vsub.f32 %v500, %v501
        %v503 = vand.u32 %v502, 4294901760
        %504 = vmatpush.xpose.msra.mxu0 %v503
        %v505 = vand.u32 %v313, 4294901760
        %v506 = vsub.f32 %v313, %v505
        %v507 = vand.u32 %v506, 4294901760
        %v508 = vsub.f32 %v506, %v507
        %v509 = vand.u32 %v508, 4294901760
        %510 = vmatpush.xpose.msra.mxu0 %v509
        %v511 = vand.u32 %v310, 4294901760
        %v512 = vsub.f32 %v310, %v511
        %v513 = vand.u32 %v512, 4294901760
        %v514 = vsub.f32 %v512, %v513
        %v515 = vand.u32 %v514, 4294901760
        %516 = vmatpush.xpose.msra.mxu0 %v515
        %v517 = vand.u32 %v307, 4294901760
        %v518 = vsub.f32 %v307, %v517
        %v519 = vand.u32 %v518, 4294901760
        %v520 = vsub.f32 %v518, %v519
        %v521 = vand.u32 %v520, 4294901760
        %522 = vmatpush.xpose.msra.mxu0 %v521
        %v523 = vand.u32 %v304, 4294901760
        %v524 = vsub.f32 %v304, %v523
        %v525 = vand.u32 %v524, 4294901760
        %v526 = vsub.f32 %v524, %v525
        %v527 = vand.u32 %v526, 4294901760
        %528 = vmatpush.xpose.msra.mxu0 %v527
        %v529 = vand.u32 %v301, 4294901760
        %v530 = vsub.f32 %v301, %v529
        %v531 = vand.u32 %v530, 4294901760
        %v532 = vsub.f32 %v530, %v531
        %v533 = vand.u32 %v532, 4294901760
        %534 = vmatpush.xpose.msra.mxu0 %v533
        %v535 = vand.u32 %v298, 4294901760
        %v536 = vsub.f32 %v298, %v535
        %v537 = vand.u32 %v536, 4294901760
        %v538 = vsub.f32 %v536, %v537
        %v539 = vand.u32 %v538, 4294901760
        %540 = vmatpush.xpose.msra.mxu0 %v539
        %v541 = vand.u32 %v295, 4294901760
        %v542 = vsub.f32 %v295, %v541
        %v543 = vand.u32 %v542, 4294901760
        %v544 = vsub.f32 %v542, %v543
        %v545 = vand.u32 %v544, 4294901760
        %546 = vmatpush.xpose.msra.mxu0 %v545
        %v547 = vand.u32 %v292, 4294901760
        %v548 = vsub.f32 %v292, %v547
        %v549 = vand.u32 %v548, 4294901760
        %v550 = vsub.f32 %v548, %v549
        %v551 = vand.u32 %v550, 4294901760
        %552 = vmatpush.xpose.msra.mxu0 %v551
        %v553 = vand.u32 %v289, 4294901760
        %v554 = vsub.f32 %v289, %v553
        %v555 = vand.u32 %v554, 4294901760
        %v556 = vsub.f32 %v554, %v555
        %v557 = vand.u32 %v556, 4294901760
        %558 = vmatpush.xpose.msra.mxu0 %v557
        %v559 = vand.u32 %v286, 4294901760
        %v560 = vsub.f32 %v286, %v559
        %v561 = vand.u32 %v560, 4294901760
        %v562 = vsub.f32 %v560, %v561
        %v563 = vand.u32 %v562, 4294901760
        %564 = vmatpush.xpose.msra.mxu0 %v563
        %v565 = vand.u32 %v283, 4294901760
        %v566 = vsub.f32 %v283, %v565
        %v567 = vand.u32 %v566, 4294901760
        %v568 = vsub.f32 %v566, %v567
        %v569 = vand.u32 %v568, 4294901760
        %570 = vmatpush.xpose.msra.mxu0 %v569
        %v571 = vand.u32 %v259, 4294901760
        %572 = vmatmul.f32.gmra.mxu0 %v571
        %v573 = vpop.f32.mrf.mxu0
        %v574 = vadd.f32 %v417, %v573
        %v575 = vand.u32 %v262, 4294901760
        %576 = vmatmul.f32.gmra.mxu0 %v575
        %v577 = vpop.f32.mrf.mxu0
        %v578 = vadd.f32 %v425, %v577
        %v579 = vand.u32 %v265, 4294901760
        %580 = vmatmul.f32.gmra.mxu0 %v579
        %v581 = vpop.f32.mrf.mxu0
        %v582 = vadd.f32 %v433, %v581
        %v583 = vand.u32 %v268, 4294901760
        %584 = vmatmul.f32.gmra.mxu0 %v583
        %v585 = vpop.f32.mrf.mxu0
        %v586 = vadd.f32 %v441, %v585
        %v587 = vand.u32 %v271, 4294901760
        %588 = vmatmul.f32.gmra.mxu0 %v587
        %v589 = vpop.f32.mrf.mxu0
        %v590 = vadd.f32 %v449, %v589
        %v591 = vand.u32 %v274, 4294901760
        %592 = vmatmul.f32.gmra.mxu0 %v591
        %v593 = vpop.f32.mrf.mxu0
        %v594 = vadd.f32 %v457, %v593
        %v595 = vand.u32 %v277, 4294901760
        %596 = vmatmul.f32.gmra.mxu0 %v595
        %v597 = vpop.f32.mrf.mxu0
        %v598 = vadd.f32 %v465, %v597
        %v599 = vand.u32 %v280, 4294901760
        %600 = vmatmul.f32.gmra.mxu0 %v599
        %v601 = vpop.f32.mrf.mxu0
        %v602 = vadd.f32 %v473, %v601
        %603 = vdwg.mxu0
        %v604 = vand.u32 %v328, 4294901760
        %v605 = vsub.f32 %v328, %v604
        %606 = vmatpush.xpose.msra.mxu0 %v605
        %v607 = vand.u32 %v325, 4294901760
        %v608 = vsub.f32 %v325, %v607
        %609 = vmatpush.xpose.msra.mxu0 %v608
        %v610 = vand.u32 %v322, 4294901760
        %v611 = vsub.f32 %v322, %v610
        %612 = vmatpush.xpose.msra.mxu0 %v611
        %v613 = vand.u32 %v319, 4294901760
        %v614 = vsub.f32 %v319, %v613
        %615 = vmatpush.xpose.msra.mxu0 %v614
        %v616 = vand.u32 %v316, 4294901760
        %v617 = vsub.f32 %v316, %v616
        %618 = vmatpush.xpose.msra.mxu0 %v617
        %v619 = vand.u32 %v313, 4294901760
        %v620 = vsub.f32 %v313, %v619
        %621 = vmatpush.xpose.msra.mxu0 %v620
        %v622 = vand.u32 %v310, 4294901760
        %v623 = vsub.f32 %v310, %v622
        %624 = vmatpush.xpose.msra.mxu0 %v623
        %v625 = vand.u32 %v307, 4294901760
        %v626 = vsub.f32 %v307, %v625
        %627 = vmatpush.xpose.msra.mxu0 %v626
        %v628 = vand.u32 %v304, 4294901760
        %v629 = vsub.f32 %v304, %v628
        %630 = vmatpush.xpose.msra.mxu0 %v629
        %v631 = vand.u32 %v301, 4294901760
        %v632 = vsub.f32 %v301, %v631
        %633 = vmatpush.xpose.msra.mxu0 %v632
        %v634 = vand.u32 %v298, 4294901760
        %v635 = vsub.f32 %v298, %v634
        %636 = vmatpush.xpose.msra.mxu0 %v635
        %v637 = vand.u32 %v295, 4294901760
        %v638 = vsub.f32 %v295, %v637
        %639 = vmatpush.xpose.msra.mxu0 %v638
        %v640 = vand.u32 %v292, 4294901760
        %v641 = vsub.f32 %v292, %v640
        %642 = vmatpush.xpose.msra.mxu0 %v641
        %v643 = vand.u32 %v289, 4294901760
        %v644 = vsub.f32 %v289, %v643
        %645 = vmatpush.xpose.msra.mxu0 %v644
        %v646 = vand.u32 %v286, 4294901760
        %v647 = vsub.f32 %v286, %v646
        %648 = vmatpush.xpose.msra.mxu0 %v647
        %v649 = vand.u32 %v283, 4294901760
        %v650 = vsub.f32 %v283, %v649
        %651 = vmatpush.xpose.msra.mxu0 %v650
        %v652 = vand.u32 %v259, 4294901760
        %v653 = vsub.f32 %v259, %v652
        %654 = vmatmul.f32.gmra.mxu0 %v653
        %v655 = vpop.f32.mrf.mxu0
        %v656 = vadd.f32 %v574, %v655
        %v657 = vand.u32 %v262, 4294901760
        %v658 = vsub.f32 %v262, %v657
        %659 = vmatmul.f32.gmra.mxu0 %v658
        %v660 = vpop.f32.mrf.mxu0
        %v661 = vadd.f32 %v578, %v660
        %v662 = vand.u32 %v265, 4294901760
        %v663 = vsub.f32 %v265, %v662
        %664 = vmatmul.f32.gmra.mxu0 %v663
        %v665 = vpop.f32.mrf.mxu0
        %v666 = vadd.f32 %v582, %v665
        %v667 = vand.u32 %v268, 4294901760
        %v668 = vsub.f32 %v268, %v667
        %669 = vmatmul.f32.gmra.mxu0 %v668
        %v670 = vpop.f32.mrf.mxu0
        %v671 = vadd.f32 %v586, %v670
        %v672 = vand.u32 %v271, 4294901760
        %v673 = vsub.f32 %v271, %v672
        %674 = vmatmul.f32.gmra.mxu0 %v673
        %v675 = vpop.f32.mrf.mxu0
        %v676 = vadd.f32 %v590, %v675
        %v677 = vand.u32 %v274, 4294901760
        %v678 = vsub.f32 %v274, %v677
        %679 = vmatmul.f32.gmra.mxu0 %v678
        %v680 = vpop.f32.mrf.mxu0
        %v681 = vadd.f32 %v594, %v680
        %v682 = vand.u32 %v277, 4294901760
        %v683 = vsub.f32 %v277, %v682
        %684 = vmatmul.f32.gmra.mxu0 %v683
        %v685 = vpop.f32.mrf.mxu0
        %v686 = vadd.f32 %v598, %v685
        %v687 = vand.u32 %v280, 4294901760
        %v688 = vsub.f32 %v280, %v687
        %689 = vmatmul.f32.gmra.mxu0 %v688
        %v690 = vpop.f32.mrf.mxu0
        %v691 = vadd.f32 %v602, %v690
        %692 = vdwg.mxu0
        %v693 = vand.u32 %v328, 4294901760
        %694 = vmatpush.xpose.msra.mxu0 %v693
        %v695 = vand.u32 %v325, 4294901760
        %696 = vmatpush.xpose.msra.mxu0 %v695
        %v697 = vand.u32 %v322, 4294901760
        %698 = vmatpush.xpose.msra.mxu0 %v697
        %v699 = vand.u32 %v319, 4294901760
        %700 = vmatpush.xpose.msra.mxu0 %v699
        %v701 = vand.u32 %v316, 4294901760
        %702 = vmatpush.xpose.msra.mxu0 %v701
        %v703 = vand.u32 %v313, 4294901760
        %704 = vmatpush.xpose.msra.mxu0 %v703
        %v705 = vand.u32 %v310, 4294901760
        %706 = vmatpush.xpose.msra.mxu0 %v705
        %v707 = vand.u32 %v307, 4294901760
        %708 = vmatpush.xpose.msra.mxu0 %v707
        %v709 = vand.u32 %v304, 4294901760
        %710 = vmatpush.xpose.msra.mxu0 %v709
        %v711 = vand.u32 %v301, 4294901760
        %712 = vmatpush.xpose.msra.mxu0 %v711
        %v713 = vand.u32 %v298, 4294901760
        %714 = vmatpush.xpose.msra.mxu0 %v713
        %v715 = vand.u32 %v295, 4294901760
        %716 = vmatpush.xpose.msra.mxu0 %v715
        %v717 = vand.u32 %v292, 4294901760
        %718 = vmatpush.xpose.msra.mxu0 %v717
        %v719 = vand.u32 %v289, 4294901760
        %720 = vmatpush.xpose.msra.mxu0 %v719
        %v721 = vand.u32 %v286, 4294901760
        %722 = vmatpush.xpose.msra.mxu0 %v721
        %v723 = vand.u32 %v283, 4294901760
        %724 = vmatpush.xpose.msra.mxu0 %v723
        %v725 = vand.u32 %v259, 4294901760
        %v726 = vsub.f32 %v259, %v725
        %v727 = vand.u32 %v726, 4294901760
        %728 = vmatmul.f32.gmra.mxu0 %v727
        %v729 = vpop.f32.mrf.mxu0
        %v730 = vadd.f32 %v656, %v729
        %v731 = vand.u32 %v262, 4294901760
        %v732 = vsub.f32 %v262, %v731
        %v733 = vand.u32 %v732, 4294901760
        %734 = vmatmul.f32.gmra.mxu0 %v733
        %v735 = vpop.f32.mrf.mxu0
        %v736 = vadd.f32 %v661, %v735
        %v737 = vand.u32 %v265, 4294901760
        %v738 = vsub.f32 %v265, %v737
        %v739 = vand.u32 %v738, 4294901760
        %740 = vmatmul.f32.gmra.mxu0 %v739
        %v741 = vpop.f32.mrf.mxu0
        %v742 = vadd.f32 %v666, %v741
        %v743 = vand.u32 %v268, 4294901760
        %v744 = vsub.f32 %v268, %v743
        %v745 = vand.u32 %v744, 4294901760
        %746 = vmatmul.f32.gmra.mxu0 %v745
        %v747 = vpop.f32.mrf.mxu0
        %v748 = vadd.f32 %v671, %v747
        %v749 = vand.u32 %v271, 4294901760
        %v750 = vsub.f32 %v271, %v749
        %v751 = vand.u32 %v750, 4294901760
        %752 = vmatmul.f32.gmra.mxu0 %v751
        %v753 = vpop.f32.mrf.mxu0
        %v754 = vadd.f32 %v676, %v753
        %v755 = vand.u32 %v274, 4294901760
        %v756 = vsub.f32 %v274, %v755
        %v757 = vand.u32 %v756, 4294901760
        %758 = vmatmul.f32.gmra.mxu0 %v757
        %v759 = vpop.f32.mrf.mxu0
        %v760 = vadd.f32 %v681, %v759
        %v761 = vand.u32 %v277, 4294901760
        %v762 = vsub.f32 %v277, %v761
        %v763 = vand.u32 %v762, 4294901760
        %764 = vmatmul.f32.gmra.mxu0 %v763
        %v765 = vpop.f32.mrf.mxu0
        %v766 = vadd.f32 %v686, %v765
        %v767 = vand.u32 %v280, 4294901760
        %v768 = vsub.f32 %v280, %v767
        %v769 = vand.u32 %v768, 4294901760
        %770 = vmatmul.f32.gmra.mxu0 %v769
        %v771 = vpop.f32.mrf.mxu0
        %v772 = vadd.f32 %v691, %v771
        %773 = vdwg.mxu0
        %v774 = vand.u32 %v328, 4294901760
        %v775 = vsub.f32 %v328, %v774
        %v776 = vand.u32 %v775, 4294901760
        %777 = vmatpush.xpose.msra.mxu0 %v776
        %v778 = vand.u32 %v325, 4294901760
        %v779 = vsub.f32 %v325, %v778
        %v780 = vand.u32 %v779, 4294901760
        %781 = vmatpush.xpose.msra.mxu0 %v780
        %v782 = vand.u32 %v322, 4294901760
        %v783 = vsub.f32 %v322, %v782
        %v784 = vand.u32 %v783, 4294901760
        %785 = vmatpush.xpose.msra.mxu0 %v784
        %v786 = vand.u32 %v319, 4294901760
        %v787 = vsub.f32 %v319, %v786
        %v788 = vand.u32 %v787, 4294901760
        %789 = vmatpush.xpose.msra.mxu0 %v788
        %v790 = vand.u32 %v316, 4294901760
        %v791 = vsub.f32 %v316, %v790
        %v792 = vand.u32 %v791, 4294901760
        %793 = vmatpush.xpose.msra.mxu0 %v792
        %v794 = vand.u32 %v313, 4294901760
        %v795 = vsub.f32 %v313, %v794
        %v796 = vand.u32 %v795, 4294901760
        %797 = vmatpush.xpose.msra.mxu0 %v796
        %v798 = vand.u32 %v310, 4294901760
        %v799 = vsub.f32 %v310, %v798
        %v800 = vand.u32 %v799, 4294901760
        %801 = vmatpush.xpose.msra.mxu0 %v800
        %v802 = vand.u32 %v307, 4294901760
        %v803 = vsub.f32 %v307, %v802
        %v804 = vand.u32 %v803, 4294901760
        %805 = vmatpush.xpose.msra.mxu0 %v804
        %v806 = vand.u32 %v304, 4294901760
        %v807 = vsub.f32 %v304, %v806
        %v808 = vand.u32 %v807, 4294901760
        %809 = vmatpush.xpose.msra.mxu0 %v808
        %v810 = vand.u32 %v301, 4294901760
        %v811 = vsub.f32 %v301, %v810
        %v812 = vand.u32 %v811, 4294901760
        %813 = vmatpush.xpose.msra.mxu0 %v812
        %v814 = vand.u32 %v298, 4294901760
        %v815 = vsub.f32 %v298, %v814
        %v816 = vand.u32 %v815, 4294901760
        %817 = vmatpush.xpose.msra.mxu0 %v816
        %v818 = vand.u32 %v295, 4294901760
        %v819 = vsub.f32 %v295, %v818
        %v820 = vand.u32 %v819, 4294901760
        %821 = vmatpush.xpose.msra.mxu0 %v820
        %v822 = vand.u32 %v292, 4294901760
        %v823 = vsub.f32 %v292, %v822
        %v824 = vand.u32 %v823, 4294901760
        %825 = vmatpush.xpose.msra.mxu0 %v824
        %v826 = vand.u32 %v289, 4294901760
        %v827 = vsub.f32 %v289, %v826
        %v828 = vand.u32 %v827, 4294901760
        %829 = vmatpush.xpose.msra.mxu0 %v828
        %v830 = vand.u32 %v286, 4294901760
        %v831 = vsub.f32 %v286, %v830
        %v832 = vand.u32 %v831, 4294901760
        %833 = vmatpush.xpose.msra.mxu0 %v832
        %v834 = vand.u32 %v283, 4294901760
        %v835 = vsub.f32 %v283, %v834
        %v836 = vand.u32 %v835, 4294901760
        %837 = vmatpush.xpose.msra.mxu0 %v836
        %v838 = vand.u32 %v259, 4294901760
        %839 = vmatmul.f32.gmra.mxu0 %v838
        %v840 = vpop.f32.mrf.mxu0
        %v841 = vadd.f32 %v730, %v840
        %v842 = vand.u32 %v262, 4294901760
        %843 = vmatmul.f32.gmra.mxu0 %v842
        %v844 = vpop.f32.mrf.mxu0
        %v845 = vadd.f32 %v736, %v844
        %v846 = vand.u32 %v265, 4294901760
        %847 = vmatmul.f32.gmra.mxu0 %v846
        %v848 = vpop.f32.mrf.mxu0
        %v849 = vadd.f32 %v742, %v848
        %v850 = vand.u32 %v268, 4294901760
        %851 = vmatmul.f32.gmra.mxu0 %v850
        %v852 = vpop.f32.mrf.mxu0
        %v853 = vadd.f32 %v748, %v852
        %v854 = vand.u32 %v271, 4294901760
        %855 = vmatmul.f32.gmra.mxu0 %v854
        %v856 = vpop.f32.mrf.mxu0
        %v857 = vadd.f32 %v754, %v856
        %v858 = vand.u32 %v274, 4294901760
        %859 = vmatmul.f32.gmra.mxu0 %v858
        %v860 = vpop.f32.mrf.mxu0
        %v861 = vadd.f32 %v760, %v860
        %v862 = vand.u32 %v277, 4294901760
        %863 = vmatmul.f32.gmra.mxu0 %v862
        %v864 = vpop.f32.mrf.mxu0
        %v865 = vadd.f32 %v766, %v864
        %v866 = vand.u32 %v280, 4294901760
        %867 = vmatmul.f32.gmra.mxu0 %v866
        %v868 = vpop.f32.mrf.mxu0
        %v869 = vadd.f32 %v772, %v868
        %870 = vdwg.mxu0
        %v871 = vand.u32 %v328, 4294901760
        %872 = vmatpush.xpose.msra.mxu0 %v871
        %v873 = vand.u32 %v325, 4294901760
        %874 = vmatpush.xpose.msra.mxu0 %v873
        %v875 = vand.u32 %v322, 4294901760
        %876 = vmatpush.xpose.msra.mxu0 %v875
        %v877 = vand.u32 %v319, 4294901760
        %878 = vmatpush.xpose.msra.mxu0 %v877
        %v879 = vand.u32 %v316, 4294901760
        %880 = vmatpush.xpose.msra.mxu0 %v879
        %v881 = vand.u32 %v313, 4294901760
        %882 = vmatpush.xpose.msra.mxu0 %v881
        %v883 = vand.u32 %v310, 4294901760
        %884 = vmatpush.xpose.msra.mxu0 %v883
        %v885 = vand.u32 %v307, 4294901760
        %886 = vmatpush.xpose.msra.mxu0 %v885
        %v887 = vand.u32 %v304, 4294901760
        %888 = vmatpush.xpose.msra.mxu0 %v887
        %v889 = vand.u32 %v301, 4294901760
        %890 = vmatpush.xpose.msra.mxu0 %v889
        %v891 = vand.u32 %v298, 4294901760
        %892 = vmatpush.xpose.msra.mxu0 %v891
        %v893 = vand.u32 %v295, 4294901760
        %894 = vmatpush.xpose.msra.mxu0 %v893
        %v895 = vand.u32 %v292, 4294901760
        %896 = vmatpush.xpose.msra.mxu0 %v895
        %v897 = vand.u32 %v289, 4294901760
        %898 = vmatpush.xpose.msra.mxu0 %v897
        %v899 = vand.u32 %v286, 4294901760
        %900 = vmatpush.xpose.msra.mxu0 %v899
        %v901 = vand.u32 %v283, 4294901760
        %902 = vmatpush.xpose.msra.mxu0 %v901
        %v903 = vand.u32 %v259, 4294901760
        %904 = vmatmul.f32.gmra.mxu0 %v903
        %v905 = vpop.f32.mrf.mxu0
        %v906 = vadd.f32 %v841, %v905
        %v907 = vand.u32 %v262, 4294901760
        %908 = vmatmul.f32.gmra.mxu0 %v907
        %v909 = vpop.f32.mrf.mxu0
        %v910 = vadd.f32 %v845, %v909
        %v911 = vand.u32 %v265, 4294901760
        %912 = vmatmul.f32.gmra.mxu0 %v911
        %v913 = vpop.f32.mrf.mxu0
        %v914 = vadd.f32 %v849, %v913
        %v915 = vand.u32 %v268, 4294901760
        %916 = vmatmul.f32.gmra.mxu0 %v915
        %v917 = vpop.f32.mrf.mxu0
        %v918 = vadd.f32 %v853, %v917
        %v919 = vand.u32 %v271, 4294901760
        %920 = vmatmul.f32.gmra.mxu0 %v919
        %v921 = vpop.f32.mrf.mxu0
        %v922 = vadd.f32 %v857, %v921
        %v923 = vand.u32 %v274, 4294901760
        %924 = vmatmul.f32.gmra.mxu0 %v923
        %v925 = vpop.f32.mrf.mxu0
        %v926 = vadd.f32 %v861, %v925
        %v927 = vand.u32 %v277, 4294901760
        %928 = vmatmul.f32.gmra.mxu0 %v927
        %v929 = vpop.f32.mrf.mxu0
        %v930 = vadd.f32 %v865, %v929
        %v931 = vand.u32 %v280, 4294901760
        %932 = vmatmul.f32.gmra.mxu0 %v931
        %v933 = vpop.f32.mrf.mxu0
        %v934 = vadd.f32 %v869, %v933
        %935 = vdwg.mxu0
        %v936 = vand.u32 %v376, 4294901760
        %937 = vmatpush.xpose.msra.mxu0 %v936
        %v938 = vand.u32 %v373, 4294901760
        %939 = vmatpush.xpose.msra.mxu0 %v938
        %v940 = vand.u32 %v370, 4294901760
        %941 = vmatpush.xpose.msra.mxu0 %v940
        %v942 = vand.u32 %v367, 4294901760
        %943 = vmatpush.xpose.msra.mxu0 %v942
        %v944 = vand.u32 %v364, 4294901760
        %945 = vmatpush.xpose.msra.mxu0 %v944
        %v946 = vand.u32 %v361, 4294901760
        %947 = vmatpush.xpose.msra.mxu0 %v946
        %v948 = vand.u32 %v358, 4294901760
        %949 = vmatpush.xpose.msra.mxu0 %v948
        %v950 = vand.u32 %v355, 4294901760
        %951 = vmatpush.xpose.msra.mxu0 %v950
        %v952 = vand.u32 %v352, 4294901760
        %953 = vmatpush.xpose.msra.mxu0 %v952
        %v954 = vand.u32 %v349, 4294901760
        %955 = vmatpush.xpose.msra.mxu0 %v954
        %v956 = vand.u32 %v346, 4294901760
        %957 = vmatpush.xpose.msra.mxu0 %v956
        %v958 = vand.u32 %v343, 4294901760
        %959 = vmatpush.xpose.msra.mxu0 %v958
        %v960 = vand.u32 %v340, 4294901760
        %961 = vmatpush.xpose.msra.mxu0 %v960
        %v962 = vand.u32 %v337, 4294901760
        %963 = vmatpush.xpose.msra.mxu0 %v962
        %v964 = vand.u32 %v334, 4294901760
        %965 = vmatpush.xpose.msra.mxu0 %v964
        %v966 = vand.u32 %v331, 4294901760
        %967 = vmatpush.xpose.msra.mxu0 %v966
        %v968 = vand.u32 %v259, 4294901760
        %v969 = vsub.f32 %v259, %v968
        %v970 = vand.u32 %v969, 4294901760
        %v971 = vsub.f32 %v969, %v970
        %v972 = vand.u32 %v971, 4294901760
        %973 = vmatmul.f32.gmra.mxu0 %v972
        %v974 = vpop.f32.mrf.mxu0
        %v975 = vadd.f32 0.0, %v974
        %v976 = vand.u32 %v262, 4294901760
        %v977 = vsub.f32 %v262, %v976
        %v978 = vand.u32 %v977, 4294901760
        %v979 = vsub.f32 %v977, %v978
        %v980 = vand.u32 %v979, 4294901760
        %981 = vmatmul.f32.gmra.mxu0 %v980
        %v982 = vpop.f32.mrf.mxu0
        %v983 = vadd.f32 0.0, %v982
        %v984 = vand.u32 %v265, 4294901760
        %v985 = vsub.f32 %v265, %v984
        %v986 = vand.u32 %v985, 4294901760
        %v987 = vsub.f32 %v985, %v986
        %v988 = vand.u32 %v987, 4294901760
        %989 = vmatmul.f32.gmra.mxu0 %v988
        %v990 = vpop.f32.mrf.mxu0
        %v991 = vadd.f32 0.0, %v990
        %v992 = vand.u32 %v268, 4294901760
        %v993 = vsub.f32 %v268, %v992
        %v994 = vand.u32 %v993, 4294901760
        %v995 = vsub.f32 %v993, %v994
        %v996 = vand.u32 %v995, 4294901760
        %997 = vmatmul.f32.gmra.mxu0 %v996
        %v998 = vpop.f32.mrf.mxu0
        %v999 = vadd.f32 0.0, %v998
        %v1000 = vand.u32 %v271, 4294901760
        %v1001 = vsub.f32 %v271, %v1000
        %v1002 = vand.u32 %v1001, 4294901760
        %v1003 = vsub.f32 %v1001, %v1002
        %v1004 = vand.u32 %v1003, 4294901760
        %1005 = vmatmul.f32.gmra.mxu0 %v1004
        %v1006 = vpop.f32.mrf.mxu0
        %v1007 = vadd.f32 0.0, %v1006
        %v1008 = vand.u32 %v274, 4294901760
        %v1009 = vsub.f32 %v274, %v1008
        %v1010 = vand.u32 %v1009, 4294901760
        %v1011 = vsub.f32 %v1009, %v1010
        %v1012 = vand.u32 %v1011, 4294901760
        %1013 = vmatmul.f32.gmra.mxu0 %v1012
        %v1014 = vpop.f32.mrf.mxu0
        %v1015 = vadd.f32 0.0, %v1014
        %v1016 = vand.u32 %v277, 4294901760
        %v1017 = vsub.f32 %v277, %v1016
        %v1018 = vand.u32 %v1017, 4294901760
        %v1019 = vsub.f32 %v1017, %v1018
        %v1020 = vand.u32 %v1019, 4294901760
        %1021 = vmatmul.f32.gmra.mxu0 %v1020
        %v1022 = vpop.f32.mrf.mxu0
        %v1023 = vadd.f32 0.0, %v1022
        %v1024 = vand.u32 %v280, 4294901760
        %v1025 = vsub.f32 %v280, %v1024
        %v1026 = vand.u32 %v1025, 4294901760
        %v1027 = vsub.f32 %v1025, %v1026
        %v1028 = vand.u32 %v1027, 4294901760
        %1029 = vmatmul.f32.gmra.mxu0 %v1028
        %v1030 = vpop.f32.mrf.mxu0
        %v1031 = vadd.f32 0.0, %v1030
        %1032 = vdwg.mxu0
        %v1033 = vand.u32 %v376, 4294901760
        %v1034 = vsub.f32 %v376, %v1033
        %v1035 = vand.u32 %v1034, 4294901760
        %v1036 = vsub.f32 %v1034, %v1035
        %v1037 = vand.u32 %v1036, 4294901760
        %1038 = vmatpush.xpose.msra.mxu0 %v1037
        %v1039 = vand.u32 %v373, 4294901760
        %v1040 = vsub.f32 %v373, %v1039
        %v1041 = vand.u32 %v1040, 4294901760
        %v1042 = vsub.f32 %v1040, %v1041
        %v1043 = vand.u32 %v1042, 4294901760
        %1044 = vmatpush.xpose.msra.mxu0 %v1043
        %v1045 = vand.u32 %v370, 4294901760
        %v1046 = vsub.f32 %v370, %v1045
        %v1047 = vand.u32 %v1046, 4294901760
        %v1048 = vsub.f32 %v1046, %v1047
        %v1049 = vand.u32 %v1048, 4294901760
        %1050 = vmatpush.xpose.msra.mxu0 %v1049
        %v1051 = vand.u32 %v367, 4294901760
        %v1052 = vsub.f32 %v367, %v1051
        %v1053 = vand.u32 %v1052, 4294901760
        %v1054 = vsub.f32 %v1052, %v1053
        %v1055 = vand.u32 %v1054, 4294901760
        %1056 = vmatpush.xpose.msra.mxu0 %v1055
        %v1057 = vand.u32 %v364, 4294901760
        %v1058 = vsub.f32 %v364, %v1057
        %v1059 = vand.u32 %v1058, 4294901760
        %v1060 = vsub.f32 %v1058, %v1059
        %v1061 = vand.u32 %v1060, 4294901760
        %1062 = vmatpush.xpose.msra.mxu0 %v1061
        %v1063 = vand.u32 %v361, 4294901760
        %v1064 = vsub.f32 %v361, %v1063
        %v1065 = vand.u32 %v1064, 4294901760
        %v1066 = vsub.f32 %v1064, %v1065
        %v1067 = vand.u32 %v1066, 4294901760
        %1068 = vmatpush.xpose.msra.mxu0 %v1067
        %v1069 = vand.u32 %v358, 4294901760
        %v1070 = vsub.f32 %v358, %v1069
        %v1071 = vand.u32 %v1070, 4294901760
        %v1072 = vsub.f32 %v1070, %v1071
        %v1073 = vand.u32 %v1072, 4294901760
        %1074 = vmatpush.xpose.msra.mxu0 %v1073
        %v1075 = vand.u32 %v355, 4294901760
        %v1076 = vsub.f32 %v355, %v1075
        %v1077 = vand.u32 %v1076, 4294901760
        %v1078 = vsub.f32 %v1076, %v1077
        %v1079 = vand.u32 %v1078, 4294901760
        %1080 = vmatpush.xpose.msra.mxu0 %v1079
        %v1081 = vand.u32 %v352, 4294901760
        %v1082 = vsub.f32 %v352, %v1081
        %v1083 = vand.u32 %v1082, 4294901760
        %v1084 = vsub.f32 %v1082, %v1083
        %v1085 = vand.u32 %v1084, 4294901760
        %1086 = vmatpush.xpose.msra.mxu0 %v1085
        %v1087 = vand.u32 %v349, 4294901760
        %v1088 = vsub.f32 %v349, %v1087
        %v1089 = vand.u32 %v1088, 4294901760
        %v1090 = vsub.f32 %v1088, %v1089
        %v1091 = vand.u32 %v1090, 4294901760
        %1092 = vmatpush.xpose.msra.mxu0 %v1091
        %v1093 = vand.u32 %v346, 4294901760
        %v1094 = vsub.f32 %v346, %v1093
        %v1095 = vand.u32 %v1094, 4294901760
        %v1096 = vsub.f32 %v1094, %v1095
        %v1097 = vand.u32 %v1096, 4294901760
        %1098 = vmatpush.xpose.msra.mxu0 %v1097
        %v1099 = vand.u32 %v343, 4294901760
        %v1100 = vsub.f32 %v343, %v1099
        %v1101 = vand.u32 %v1100, 4294901760
        %v1102 = vsub.f32 %v1100, %v1101
        %v1103 = vand.u32 %v1102, 4294901760
        %1104 = vmatpush.xpose.msra.mxu0 %v1103
        %v1105 = vand.u32 %v340, 4294901760
        %v1106 = vsub.f32 %v340, %v1105
        %v1107 = vand.u32 %v1106, 4294901760
        %v1108 = vsub.f32 %v1106, %v1107
        %v1109 = vand.u32 %v1108, 4294901760
        %1110 = vmatpush.xpose.msra.mxu0 %v1109
        %v1111 = vand.u32 %v337, 4294901760
        %v1112 = vsub.f32 %v337, %v1111
        %v1113 = vand.u32 %v1112, 4294901760
        %v1114 = vsub.f32 %v1112, %v1113
        %v1115 = vand.u32 %v1114, 4294901760
        %1116 = vmatpush.xpose.msra.mxu0 %v1115
        %v1117 = vand.u32 %v334, 4294901760
        %v1118 = vsub.f32 %v334, %v1117
        %v1119 = vand.u32 %v1118, 4294901760
        %v1120 = vsub.f32 %v1118, %v1119
        %v1121 = vand.u32 %v1120, 4294901760
        %1122 = vmatpush.xpose.msra.mxu0 %v1121
        %v1123 = vand.u32 %v331, 4294901760
        %v1124 = vsub.f32 %v331, %v1123
        %v1125 = vand.u32 %v1124, 4294901760
        %v1126 = vsub.f32 %v1124, %v1125
        %v1127 = vand.u32 %v1126, 4294901760
        %1128 = vmatpush.xpose.msra.mxu0 %v1127
        %v1129 = vand.u32 %v259, 4294901760
        %1130 = vmatmul.f32.gmra.mxu0 %v1129
        %v1131 = vpop.f32.mrf.mxu0
        %v1132 = vadd.f32 %v975, %v1131
        %v1133 = vand.u32 %v262, 4294901760
        %1134 = vmatmul.f32.gmra.mxu0 %v1133
        %v1135 = vpop.f32.mrf.mxu0
        %v1136 = vadd.f32 %v983, %v1135
        %v1137 = vand.u32 %v265, 4294901760
        %1138 = vmatmul.f32.gmra.mxu0 %v1137
        %v1139 = vpop.f32.mrf.mxu0
        %v1140 = vadd.f32 %v991, %v1139
        %v1141 = vand.u32 %v268, 4294901760
        %1142 = vmatmul.f32.gmra.mxu0 %v1141
        %v1143 = vpop.f32.mrf.mxu0
        %v1144 = vadd.f32 %v999, %v1143
        %v1145 = vand.u32 %v271, 4294901760
        %1146 = vmatmul.f32.gmra.mxu0 %v1145
        %v1147 = vpop.f32.mrf.mxu0
        %v1148 = vadd.f32 %v1007, %v1147
        %v1149 = vand.u32 %v274, 4294901760
        %1150 = vmatmul.f32.gmra.mxu0 %v1149
        %v1151 = vpop.f32.mrf.mxu0
        %v1152 = vadd.f32 %v1015, %v1151
        %v1153 = vand.u32 %v277, 4294901760
        %1154 = vmatmul.f32.gmra.mxu0 %v1153
        %v1155 = vpop.f32.mrf.mxu0
        %v1156 = vadd.f32 %v1023, %v1155
        %v1157 = vand.u32 %v280, 4294901760
        %1158 = vmatmul.f32.gmra.mxu0 %v1157
        %v1159 = vpop.f32.mrf.mxu0
        %v1160 = vadd.f32 %v1031, %v1159
        %1161 = vdwg.mxu0
        %v1162 = vand.u32 %v376, 4294901760
        %v1163 = vsub.f32 %v376, %v1162
        %1164 = vmatpush.xpose.msra.mxu0 %v1163
        %v1165 = vand.u32 %v373, 4294901760
        %v1166 = vsub.f32 %v373, %v1165
        %1167 = vmatpush.xpose.msra.mxu0 %v1166
        %v1168 = vand.u32 %v370, 4294901760
        %v1169 = vsub.f32 %v370, %v1168
        %1170 = vmatpush.xpose.msra.mxu0 %v1169
        %v1171 = vand.u32 %v367, 4294901760
        %v1172 = vsub.f32 %v367, %v1171
        %1173 = vmatpush.xpose.msra.mxu0 %v1172
        %v1174 = vand.u32 %v364, 4294901760
        %v1175 = vsub.f32 %v364, %v1174
        %1176 = vmatpush.xpose.msra.mxu0 %v1175
        %v1177 = vand.u32 %v361, 4294901760
        %v1178 = vsub.f32 %v361, %v1177
        %1179 = vmatpush.xpose.msra.mxu0 %v1178
        %v1180 = vand.u32 %v358, 4294901760
        %v1181 = vsub.f32 %v358, %v1180
        %1182 = vmatpush.xpose.msra.mxu0 %v1181
        %v1183 = vand.u32 %v355, 4294901760
        %v1184 = vsub.f32 %v355, %v1183
        %1185 = vmatpush.xpose.msra.mxu0 %v1184
        %v1186 = vand.u32 %v352, 4294901760
        %v1187 = vsub.f32 %v352, %v1186
        %1188 = vmatpush.xpose.msra.mxu0 %v1187
        %v1189 = vand.u32 %v349, 4294901760
        %v1190 = vsub.f32 %v349, %v1189
        %1191 = vmatpush.xpose.msra.mxu0 %v1190
        %v1192 = vand.u32 %v346, 4294901760
        %v1193 = vsub.f32 %v346, %v1192
        %1194 = vmatpush.xpose.msra.mxu0 %v1193
        %v1195 = vand.u32 %v343, 4294901760
        %v1196 = vsub.f32 %v343, %v1195
        %1197 = vmatpush.xpose.msra.mxu0 %v1196
        %v1198 = vand.u32 %v340, 4294901760
        %v1199 = vsub.f32 %v340, %v1198
        %1200 = vmatpush.xpose.msra.mxu0 %v1199
        %v1201 = vand.u32 %v337, 4294901760
        %v1202 = vsub.f32 %v337, %v1201
        %1203 = vmatpush.xpose.msra.mxu0 %v1202
        %v1204 = vand.u32 %v334, 4294901760
        %v1205 = vsub.f32 %v334, %v1204
        %1206 = vmatpush.xpose.msra.mxu0 %v1205
        %v1207 = vand.u32 %v331, 4294901760
        %v1208 = vsub.f32 %v331, %v1207
        %1209 = vmatpush.xpose.msra.mxu0 %v1208
        %v1210 = vand.u32 %v259, 4294901760
        %v1211 = vsub.f32 %v259, %v1210
        %1212 = vmatmul.f32.gmra.mxu0 %v1211
        %v1213 = vpop.f32.mrf.mxu0
        %v1214 = vadd.f32 %v1132, %v1213
        %v1215 = vand.u32 %v262, 4294901760
        %v1216 = vsub.f32 %v262, %v1215
        %1217 = vmatmul.f32.gmra.mxu0 %v1216
        %v1218 = vpop.f32.mrf.mxu0
        %v1219 = vadd.f32 %v1136, %v1218
        %v1220 = vand.u32 %v265, 4294901760
        %v1221 = vsub.f32 %v265, %v1220
        %1222 = vmatmul.f32.gmra.mxu0 %v1221
        %v1223 = vpop.f32.mrf.mxu0
        %v1224 = vadd.f32 %v1140, %v1223
        %v1225 = vand.u32 %v268, 4294901760
        %v1226 = vsub.f32 %v268, %v1225
        %1227 = vmatmul.f32.gmra.mxu0 %v1226
        %v1228 = vpop.f32.mrf.mxu0
        %v1229 = vadd.f32 %v1144, %v1228
        %v1230 = vand.u32 %v271, 4294901760
        %v1231 = vsub.f32 %v271, %v1230
        %1232 = vmatmul.f32.gmra.mxu0 %v1231
        %v1233 = vpop.f32.mrf.mxu0
        %v1234 = vadd.f32 %v1148, %v1233
        %v1235 = vand.u32 %v274, 4294901760
        %v1236 = vsub.f32 %v274, %v1235
        %1237 = vmatmul.f32.gmra.mxu0 %v1236
        %v1238 = vpop.f32.mrf.mxu0
        %v1239 = vadd.f32 %v1152, %v1238
        %v1240 = vand.u32 %v277, 4294901760
        %v1241 = vsub.f32 %v277, %v1240
        %1242 = vmatmul.f32.gmra.mxu0 %v1241
        %v1243 = vpop.f32.mrf.mxu0
        %v1244 = vadd.f32 %v1156, %v1243
        %v1245 = vand.u32 %v280, 4294901760
        %v1246 = vsub.f32 %v280, %v1245
        %1247 = vmatmul.f32.gmra.mxu0 %v1246
        %v1248 = vpop.f32.mrf.mxu0
        %v1249 = vadd.f32 %v1160, %v1248
        %1250 = vdwg.mxu0
        %v1251 = vand.u32 %v376, 4294901760
        %1252 = vmatpush.xpose.msra.mxu0 %v1251
        %v1253 = vand.u32 %v373, 4294901760
        %1254 = vmatpush.xpose.msra.mxu0 %v1253
        %v1255 = vand.u32 %v370, 4294901760
        %1256 = vmatpush.xpose.msra.mxu0 %v1255
        %v1257 = vand.u32 %v367, 4294901760
        %1258 = vmatpush.xpose.msra.mxu0 %v1257
        %v1259 = vand.u32 %v364, 4294901760
        %1260 = vmatpush.xpose.msra.mxu0 %v1259
        %v1261 = vand.u32 %v361, 4294901760
        %1262 = vmatpush.xpose.msra.mxu0 %v1261
        %v1263 = vand.u32 %v358, 4294901760
        %1264 = vmatpush.xpose.msra.mxu0 %v1263
        %v1265 = vand.u32 %v355, 4294901760
        %1266 = vmatpush.xpose.msra.mxu0 %v1265
        %v1267 = vand.u32 %v352, 4294901760
        %1268 = vmatpush.xpose.msra.mxu0 %v1267
        %v1269 = vand.u32 %v349, 4294901760
        %1270 = vmatpush.xpose.msra.mxu0 %v1269
        %v1271 = vand.u32 %v346, 4294901760
        %1272 = vmatpush.xpose.msra.mxu0 %v1271
        %v1273 = vand.u32 %v343, 4294901760
        %1274 = vmatpush.xpose.msra.mxu0 %v1273
        %v1275 = vand.u32 %v340, 4294901760
        %1276 = vmatpush.xpose.msra.mxu0 %v1275
        %v1277 = vand.u32 %v337, 4294901760
        %1278 = vmatpush.xpose.msra.mxu0 %v1277
        %v1279 = vand.u32 %v334, 4294901760
        %1280 = vmatpush.xpose.msra.mxu0 %v1279
        %v1281 = vand.u32 %v331, 4294901760
        %1282 = vmatpush.xpose.msra.mxu0 %v1281
        %v1283 = vand.u32 %v259, 4294901760
        %v1284 = vsub.f32 %v259, %v1283
        %v1285 = vand.u32 %v1284, 4294901760
        %1286 = vmatmul.f32.gmra.mxu0 %v1285
        %v1287 = vpop.f32.mrf.mxu0
        %v1288 = vadd.f32 %v1214, %v1287
        %v1289 = vand.u32 %v262, 4294901760
        %v1290 = vsub.f32 %v262, %v1289
        %v1291 = vand.u32 %v1290, 4294901760
        %1292 = vmatmul.f32.gmra.mxu0 %v1291
        %v1293 = vpop.f32.mrf.mxu0
        %v1294 = vadd.f32 %v1219, %v1293
        %v1295 = vand.u32 %v265, 4294901760
        %v1296 = vsub.f32 %v265, %v1295
        %v1297 = vand.u32 %v1296, 4294901760
        %1298 = vmatmul.f32.gmra.mxu0 %v1297
        %v1299 = vpop.f32.mrf.mxu0
        %v1300 = vadd.f32 %v1224, %v1299
        %v1301 = vand.u32 %v268, 4294901760
        %v1302 = vsub.f32 %v268, %v1301
        %v1303 = vand.u32 %v1302, 4294901760
        %1304 = vmatmul.f32.gmra.mxu0 %v1303
        %v1305 = vpop.f32.mrf.mxu0
        %v1306 = vadd.f32 %v1229, %v1305
        %v1307 = vand.u32 %v271, 4294901760
        %v1308 = vsub.f32 %v271, %v1307
        %v1309 = vand.u32 %v1308, 4294901760
        %1310 = vmatmul.f32.gmra.mxu0 %v1309
        %v1311 = vpop.f32.mrf.mxu0
        %v1312 = vadd.f32 %v1234, %v1311
        %v1313 = vand.u32 %v274, 4294901760
        %v1314 = vsub.f32 %v274, %v1313
        %v1315 = vand.u32 %v1314, 4294901760
        %1316 = vmatmul.f32.gmra.mxu0 %v1315
        %v1317 = vpop.f32.mrf.mxu0
        %v1318 = vadd.f32 %v1239, %v1317
        %v1319 = vand.u32 %v277, 4294901760
        %v1320 = vsub.f32 %v277, %v1319
        %v1321 = vand.u32 %v1320, 4294901760
        %1322 = vmatmul.f32.gmra.mxu0 %v1321
        %v1323 = vpop.f32.mrf.mxu0
        %v1324 = vadd.f32 %v1244, %v1323
        %v1325 = vand.u32 %v280, 4294901760
        %v1326 = vsub.f32 %v280, %v1325
        %v1327 = vand.u32 %v1326, 4294901760
        %1328 = vmatmul.f32.gmra.mxu0 %v1327
        %v1329 = vpop.f32.mrf.mxu0
        %v1330 = vadd.f32 %v1249, %v1329
        %1331 = vdwg.mxu0
        %v1332 = vand.u32 %v376, 4294901760
        %v1333 = vsub.f32 %v376, %v1332
        %v1334 = vand.u32 %v1333, 4294901760
        %1335 = vmatpush.xpose.msra.mxu0 %v1334
        %v1336 = vand.u32 %v373, 4294901760
        %v1337 = vsub.f32 %v373, %v1336
        %v1338 = vand.u32 %v1337, 4294901760
        %1339 = vmatpush.xpose.msra.mxu0 %v1338
        %v1340 = vand.u32 %v370, 4294901760
        %v1341 = vsub.f32 %v370, %v1340
        %v1342 = vand.u32 %v1341, 4294901760
        %1343 = vmatpush.xpose.msra.mxu0 %v1342
        %v1344 = vand.u32 %v367, 4294901760
        %v1345 = vsub.f32 %v367, %v1344
        %v1346 = vand.u32 %v1345, 4294901760
        %1347 = vmatpush.xpose.msra.mxu0 %v1346
        %v1348 = vand.u32 %v364, 4294901760
        %v1349 = vsub.f32 %v364, %v1348
        %v1350 = vand.u32 %v1349, 4294901760
        %1351 = vmatpush.xpose.msra.mxu0 %v1350
        %v1352 = vand.u32 %v361, 4294901760
        %v1353 = vsub.f32 %v361, %v1352
        %v1354 = vand.u32 %v1353, 4294901760
        %1355 = vmatpush.xpose.msra.mxu0 %v1354
        %v1356 = vand.u32 %v358, 4294901760
        %v1357 = vsub.f32 %v358, %v1356
        %v1358 = vand.u32 %v1357, 4294901760
        %1359 = vmatpush.xpose.msra.mxu0 %v1358
        %v1360 = vand.u32 %v355, 4294901760
        %v1361 = vsub.f32 %v355, %v1360
        %v1362 = vand.u32 %v1361, 4294901760
        %1363 = vmatpush.xpose.msra.mxu0 %v1362
        %v1364 = vand.u32 %v352, 4294901760
        %v1365 = vsub.f32 %v352, %v1364
        %v1366 = vand.u32 %v1365, 4294901760
        %1367 = vmatpush.xpose.msra.mxu0 %v1366
        %v1368 = vand.u32 %v349, 4294901760
        %v1369 = vsub.f32 %v349, %v1368
        %v1370 = vand.u32 %v1369, 4294901760
        %1371 = vmatpush.xpose.msra.mxu0 %v1370
        %v1372 = vand.u32 %v346, 4294901760
        %v1373 = vsub.f32 %v346, %v1372
        %v1374 = vand.u32 %v1373, 4294901760
        %1375 = vmatpush.xpose.msra.mxu0 %v1374
        %v1376 = vand.u32 %v343, 4294901760
        %v1377 = vsub.f32 %v343, %v1376
        %v1378 = vand.u32 %v1377, 4294901760
        %1379 = vmatpush.xpose.msra.mxu0 %v1378
        %v1380 = vand.u32 %v340, 4294901760
        %v1381 = vsub.f32 %v340, %v1380
        %v1382 = vand.u32 %v1381, 4294901760
        %1383 = vmatpush.xpose.msra.mxu0 %v1382
        %v1384 = vand.u32 %v337, 4294901760
        %v1385 = vsub.f32 %v337, %v1384
        %v1386 = vand.u32 %v1385, 4294901760
        %1387 = vmatpush.xpose.msra.mxu0 %v1386
        %v1388 = vand.u32 %v334, 4294901760
        %v1389 = vsub.f32 %v334, %v1388
        %v1390 = vand.u32 %v1389, 4294901760
        %1391 = vmatpush.xpose.msra.mxu0 %v1390
        %v1392 = vand.u32 %v331, 4294901760
        %v1393 = vsub.f32 %v331, %v1392
        %v1394 = vand.u32 %v1393, 4294901760
        %1395 = vmatpush.xpose.msra.mxu0 %v1394
        %v1396 = vand.u32 %v259, 4294901760
        %1397 = vmatmul.f32.gmra.mxu0 %v1396
        %v1398 = vpop.f32.mrf.mxu0
        %v1399 = vadd.f32 %v1288, %v1398
        %v1400 = vand.u32 %v262, 4294901760
        %1401 = vmatmul.f32.gmra.mxu0 %v1400
        %v1402 = vpop.f32.mrf.mxu0
        %v1403 = vadd.f32 %v1294, %v1402
        %v1404 = vand.u32 %v265, 4294901760
        %1405 = vmatmul.f32.gmra.mxu0 %v1404
        %v1406 = vpop.f32.mrf.mxu0
        %v1407 = vadd.f32 %v1300, %v1406
        %v1408 = vand.u32 %v268, 4294901760
        %1409 = vmatmul.f32.gmra.mxu0 %v1408
        %v1410 = vpop.f32.mrf.mxu0
        %v1411 = vadd.f32 %v1306, %v1410
        %v1412 = vand.u32 %v271, 4294901760
        %1413 = vmatmul.f32.gmra.mxu0 %v1412
        %v1414 = vpop.f32.mrf.mxu0
        %v1415 = vadd.f32 %v1312, %v1414
        %v1416 = vand.u32 %v274, 4294901760
        %1417 = vmatmul.f32.gmra.mxu0 %v1416
        %v1418 = vpop.f32.mrf.mxu0
        %v1419 = vadd.f32 %v1318, %v1418
        %v1420 = vand.u32 %v277, 4294901760
        %1421 = vmatmul.f32.gmra.mxu0 %v1420
        %v1422 = vpop.f32.mrf.mxu0
        %v1423 = vadd.f32 %v1324, %v1422
        %v1424 = vand.u32 %v280, 4294901760
        %1425 = vmatmul.f32.gmra.mxu0 %v1424
        %v1426 = vpop.f32.mrf.mxu0
        %v1427 = vadd.f32 %v1330, %v1426
        %1428 = vdwg.mxu0
        %v1429 = vand.u32 %v376, 4294901760
        %1430 = vmatpush.xpose.msra.mxu0 %v1429
        %v1431 = vand.u32 %v373, 4294901760
        %1432 = vmatpush.xpose.msra.mxu0 %v1431
        %v1433 = vand.u32 %v370, 4294901760
        %1434 = vmatpush.xpose.msra.mxu0 %v1433
        %v1435 = vand.u32 %v367, 4294901760
        %1436 = vmatpush.xpose.msra.mxu0 %v1435
        %v1437 = vand.u32 %v364, 4294901760
        %1438 = vmatpush.xpose.msra.mxu0 %v1437
        %v1439 = vand.u32 %v361, 4294901760
        %1440 = vmatpush.xpose.msra.mxu0 %v1439
        %v1441 = vand.u32 %v358, 4294901760
        %1442 = vmatpush.xpose.msra.mxu0 %v1441
        %v1443 = vand.u32 %v355, 4294901760
        %1444 = vmatpush.xpose.msra.mxu0 %v1443
        %v1445 = vand.u32 %v352, 4294901760
        %1446 = vmatpush.xpose.msra.mxu0 %v1445
        %v1447 = vand.u32 %v349, 4294901760
        %1448 = vmatpush.xpose.msra.mxu0 %v1447
        %v1449 = vand.u32 %v346, 4294901760
        %1450 = vmatpush.xpose.msra.mxu0 %v1449
        %v1451 = vand.u32 %v343, 4294901760
        %1452 = vmatpush.xpose.msra.mxu0 %v1451
        %v1453 = vand.u32 %v340, 4294901760
        %1454 = vmatpush.xpose.msra.mxu0 %v1453
        %v1455 = vand.u32 %v337, 4294901760
        %1456 = vmatpush.xpose.msra.mxu0 %v1455
        %v1457 = vand.u32 %v334, 4294901760
        %1458 = vmatpush.xpose.msra.mxu0 %v1457
        %v1459 = vand.u32 %v331, 4294901760
        %1460 = vmatpush.xpose.msra.mxu0 %v1459
        %v1461 = vand.u32 %v259, 4294901760
        %1462 = vmatmul.f32.gmra.mxu0 %v1461
        %v1463 = vpop.f32.mrf.mxu0
        %v1464 = vadd.f32 %v1399, %v1463
        %v1465 = vand.u32 %v262, 4294901760
        %1466 = vmatmul.f32.gmra.mxu0 %v1465
        %v1467 = vpop.f32.mrf.mxu0
        %v1468 = vadd.f32 %v1403, %v1467
        %v1469 = vand.u32 %v265, 4294901760
        %1470 = vmatmul.f32.gmra.mxu0 %v1469
        %v1471 = vpop.f32.mrf.mxu0
        %v1472 = vadd.f32 %v1407, %v1471
        %v1473 = vand.u32 %v268, 4294901760
        %1474 = vmatmul.f32.gmra.mxu0 %v1473
        %v1475 = vpop.f32.mrf.mxu0
        %v1476 = vadd.f32 %v1411, %v1475
        %v1477 = vand.u32 %v271, 4294901760
        %1478 = vmatmul.f32.gmra.mxu0 %v1477
        %v1479 = vpop.f32.mrf.mxu0
        %v1480 = vadd.f32 %v1415, %v1479
        %v1481 = vand.u32 %v274, 4294901760
        %1482 = vmatmul.f32.gmra.mxu0 %v1481
        %v1483 = vpop.f32.mrf.mxu0
        %v1484 = vadd.f32 %v1419, %v1483
        %v1485 = vand.u32 %v277, 4294901760
        %1486 = vmatmul.f32.gmra.mxu0 %v1485
        %v1487 = vpop.f32.mrf.mxu0
        %v1488 = vadd.f32 %v1423, %v1487
        %v1489 = vand.u32 %v280, 4294901760
        %1490 = vmatmul.f32.gmra.mxu0 %v1489
        %v1491 = vpop.f32.mrf.mxu0
        %v1492 = vadd.f32 %v1427, %v1491
        %1493 = vdwg.mxu0
        // Predicated region
        $region37: #{tpu_custom_call.1} parent=31 // pred_check
          %p1494 = pneg %p203
        $region38: #{tpu_custom_call.1} parent=31 // pred_check_branch
          %1496 = sbr.rel (%p1494) target = $region40
        $region39: #{tpu_custom_call.1} parent=31 // pred_region
          %v1497 = vmax.f32 %v906, %v914
          %v1498 = vmax.f32 %v910, %v918
          %v1499 = vmax.f32 %v1497, %v922
          %v1500 = vmax.f32 %v1498, %v926
          %v1501 = vmax.f32 %v1499, %v930
          %v1502 = vmax.f32 %v1500, %v934
          %v1503 = vmax.f32 %v1501, %v1502
          %v1504 = vrot.slane %v1503, 4
          %v1505 = vmax.f32 %v1503, %v1504
          %v1506 = vrot.slane %v1505, 2
          %v1507 = vmax.f32 %v1505, %v1506
          %v1508 = vrot.slane %v1507, 1
          %v1509 = vmax.f32 %v1507, %v1508
          %v1510 = vmax.f32 %v1464, %v1472
          %v1511 = vmax.f32 %v1468, %v1476
          %v1512 = vmax.f32 %v1510, %v1480
          %v1513 = vmax.f32 %v1511, %v1484
          %v1514 = vmax.f32 %v1512, %v1488
          %v1515 = vmax.f32 %v1513, %v1492
          %v1516 = vmax.f32 %v1514, %v1515
          %v1517 = vrot.slane %v1516, 4
          %v1518 = vmax.f32 %v1516, %v1517
          %v1519 = vrot.slane %v1518, 2
          %v1520 = vmax.f32 %v1518, %v1519
          %v1521 = vrot.slane %v1520, 1
          %v1522 = vmax.f32 %v1520, %v1521
          %v1523 = vld [vmem:[#allocation3] sm:$0x3]
          %v1526 = vrot.slane %v1522, 7
          %vm1527 = vcmask 1040384
          %v1528 = vsel %vm1527, %v1509, %v1526
          %v1530 = vmax.f32 %v1523, %v1528
          %v1531 = vld [vmem:[#allocation4] sm:$0x3]
          %v1532 = vsub.f32 %v1523, %v1530
          %v1533 = vmul.f32 %v1532, 1.442695
          %v1534 = vpow.pop %v1533
          %v1535 = vmul.f32 %v1531, %v1534
          %v1537 = vperm.slane %v1530, 0
          %v1538 = vperm.slane %v1530, 1
          %v1541 = vsub.f32 %v906, %v1537
          %v1542 = vsub.f32 %v1464, %v1538
          %v1543 = vsub.f32 %v910, %v1537
          %v1544 = vsub.f32 %v1468, %v1538
          %v1545 = vsub.f32 %v914, %v1537
          %v1546 = vsub.f32 %v1472, %v1538
          %v1547 = vsub.f32 %v918, %v1537
          %v1548 = vsub.f32 %v1476, %v1538
          %v1549 = vsub.f32 %v922, %v1537
          %v1550 = vsub.f32 %v1480, %v1538
          %v1551 = vsub.f32 %v926, %v1537
          %v1552 = vsub.f32 %v1484, %v1538
          %v1553 = vsub.f32 %v930, %v1537
          %v1554 = vsub.f32 %v1488, %v1538
          %v1555 = vsub.f32 %v934, %v1537
          %v1556 = vsub.f32 %v1492, %v1538
          %v1557 = vmul.f32 %v1541, 1.442695
          %v1558 = vpow.pop %v1557
          %v1559 = vmul.f32 %v1542, 1.442695
          %v1560 = vpow.pop %v1559
          %v1561 = vmul.f32 %v1543, 1.442695
          %v1562 = vpow.pop %v1561
          %v1563 = vmul.f32 %v1544, 1.442695
          %v1564 = vpow.pop %v1563
          %v1565 = vmul.f32 %v1545, 1.442695
          %v1566 = vpow.pop %v1565
          %v1567 = vmul.f32 %v1546, 1.442695
          %v1568 = vpow.pop %v1567
          %v1569 = vmul.f32 %v1547, 1.442695
          %v1570 = vpow.pop %v1569
          %v1571 = vmul.f32 %v1548, 1.442695
          %v1572 = vpow.pop %v1571
          %v1573 = vmul.f32 %v1549, 1.442695
          %v1574 = vpow.pop %v1573
          %v1575 = vmul.f32 %v1550, 1.442695
          %v1576 = vpow.pop %v1575
          %v1577 = vmul.f32 %v1551, 1.442695
          %v1578 = vpow.pop %v1577
          %v1579 = vmul.f32 %v1552, 1.442695
          %v1580 = vpow.pop %v1579
          %v1581 = vmul.f32 %v1553, 1.442695
          %v1582 = vpow.pop %v1581
          %v1583 = vmul.f32 %v1554, 1.442695
          %v1584 = vpow.pop %v1583
          %v1585 = vmul.f32 %v1555, 1.442695
          %v1586 = vpow.pop %v1585
          %v1587 = vmul.f32 %v1556, 1.442695
          %v1588 = vpow.pop %v1587
          %v1589 = vadd.f32 %v1558, %v1562
          %v1590 = vadd.f32 %v1589, %v1566
          %v1591 = vadd.f32 %v1590, %v1570
          %v1592 = vadd.f32 %v1591, %v1574
          %v1593 = vadd.f32 %v1592, %v1578
          %v1594 = vadd.f32 %v1593, %v1582
          %v1595 = vadd.f32 %v1594, %v1586
          %v1596 = vrot.slane %v1595, 4
          %v1597 = vadd.f32 %v1595, %v1596
          %v1598 = vrot.slane %v1597, 2
          %v1599 = vadd.f32 %v1597, %v1598
          %v1600 = vrot.slane %v1599, 1
          %v1601 = vadd.f32 %v1599, %v1600
          %v1602 = vadd.f32 %v1560, %v1564
          %v1603 = vadd.f32 %v1602, %v1568
          %v1604 = vadd.f32 %v1603, %v1572
          %v1605 = vadd.f32 %v1604, %v1576
          %v1606 = vadd.f32 %v1605, %v1580
          %v1607 = vadd.f32 %v1606, %v1584
          %v1608 = vadd.f32 %v1607, %v1588
          %v1609 = vrot.slane %v1608, 4
          %v1610 = vadd.f32 %v1608, %v1609
          %v1611 = vrot.slane %v1610, 2
          %v1612 = vadd.f32 %v1610, %v1611
          %v1613 = vrot.slane %v1612, 1
          %v1614 = vadd.f32 %v1612, %v1613
          %v1617 = vrot.slane %v1614, 7
          %v1618 = vsel %vm1527, %v1601, %v1617
          %v1620 = vadd.f32 %v1535, %v1618
          %v1621 = vlaneseq
          %vm1622 = vcmp.ge.s32.totalorder %v1621, 0
          %vm1623 = vcmp.lt.s32.totalorder %v1621, 256
          %vm1624 = vmand %vm1622, %vm1623
          %1625 = vst.msk [vmem:[#allocation4] sm:$0x3] %vm1624, %v1620
          %1626 = vst.msk [vmem:[#allocation3] sm:$0x3] %vm1624, %v1530
        $region40: #{tpu_custom_call.1} parent=31 // pred_fallthru
          _
        %p1627 = scmp.eq.s32.totalorder %s19, 1
        // Predicated region
        $region41: #{tpu_custom_call.1} parent=31 // pred_check
          %p1628 = pneg %p1627
        $region42: #{tpu_custom_call.1} parent=31 // pred_check_branch
          %1630 = sbr.rel (%p1628) target = $region44
        $region43: #{tpu_custom_call.1} parent=31 // pred_region
          %v1631 = vld [vmem:[%s200] sm:$0xff]
          %v1632 = vld [vmem:[%s200 + $0x8] sm:$0xff]
          %v1633 = vld [vmem:[%s200 + $0x10] sm:$0xff]
          %v1634 = vld [vmem:[%s200 + $0x18] sm:$0xff]
          %v1635 = vld [vmem:[%s200 + $0x20] sm:$0xff]
          %v1636 = vld [vmem:[%s200 + $0x28] sm:$0xff]
          %v1637 = vld [vmem:[%s200 + $0x30] sm:$0xff]
          %v1638 = vld [vmem:[%s200 + $0x38] sm:$0xff]
          %v1639 = vld [vmem:[%s200 + $0x40] sm:$0xff]
          %v1640 = vld [vmem:[%s200 + $0x48] sm:$0xff]
          %v1641 = vld [vmem:[%s200 + $0x50] sm:$0xff]
          %v1642 = vld [vmem:[%s200 + $0x58] sm:$0xff]
          %v1643 = vld [vmem:[%s200 + $0x60] sm:$0xff]
          %v1644 = vld [vmem:[%s200 + $0x68] sm:$0xff]
          %v1645 = vld [vmem:[%s200 + $0x70] sm:$0xff]
          %v1646 = vld [vmem:[%s200 + $0x78] sm:$0xff]
          %v1647 = vmax.f32 %v906, %v1464
          %1648 = vmax.xlane.f32.xlu0 %v1647
          %v1649 = vpop.xlane.xlu0 %1648
          %v1650 = vmax.f32 %v910, %v1468
          %1651 = vmax.xlane.f32.xlu0 %v1650
          %v1652 = vpop.xlane.xlu0 %1651
          %v1653 = vmax.f32 %v914, %v1472
          %1654 = vmax.xlane.f32.xlu0 %v1653
          %v1655 = vpop.xlane.xlu0 %1654
          %v1656 = vmax.f32 %v918, %v1476
          %1657 = vmax.xlane.f32.xlu0 %v1656
          %v1658 = vpop.xlane.xlu0 %1657
          %v1659 = vmax.f32 %v922, %v1480
          %1660 = vmax.xlane.f32.xlu0 %v1659
          %v1661 = vpop.xlane.xlu0 %1660
          %v1662 = vmax.f32 %v926, %v1484
          %1663 = vmax.xlane.f32.xlu0 %v1662
          %v1664 = vpop.xlane.xlu0 %1663
          %v1665 = vmax.f32 %v930, %v1488
          %1666 = vmax.xlane.f32.xlu0 %v1665
          %v1667 = vpop.xlane.xlu0 %1666
          %v1668 = vmax.f32 %v934, %v1492
          %1669 = vmax.xlane.f32.xlu0 %v1668
          %v1670 = vpop.xlane.xlu0 %1669
          %v1671 = vsub.f32 %v906, %v1649
          %v1672 = vsub.f32 %v1464, %v1649
          %v1673 = vsub.f32 %v910, %v1652
          %v1674 = vsub.f32 %v1468, %v1652
          %v1675 = vsub.f32 %v914, %v1655
          %v1676 = vsub.f32 %v1472, %v1655
          %v1677 = vsub.f32 %v918, %v1658
          %v1678 = vsub.f32 %v1476, %v1658
          %v1679 = vsub.f32 %v922, %v1661
          %v1680 = vsub.f32 %v1480, %v1661
          %v1681 = vsub.f32 %v926, %v1664
          %v1682 = vsub.f32 %v1484, %v1664
          %v1683 = vsub.f32 %v930, %v1667
          %v1684 = vsub.f32 %v1488, %v1667
          %v1685 = vsub.f32 %v934, %v1670
          %v1686 = vsub.f32 %v1492, %v1670
          %v1687 = vmul.f32 %v1671, 1.442695
          %v1688 = vpow.pop %v1687
          %v1689 = vmul.f32 %v1672, 1.442695
          %v1690 = vpow.pop %v1689
          %v1691 = vmul.f32 %v1673, 1.442695
          %v1692 = vpow.pop %v1691
          %v1693 = vmul.f32 %v1674, 1.442695
          %v1694 = vpow.pop %v1693
          %v1695 = vmul.f32 %v1675, 1.442695
          %v1696 = vpow.pop %v1695
          %v1697 = vmul.f32 %v1676, 1.442695
          %v1698 = vpow.pop %v1697
          %v1699 = vmul.f32 %v1677, 1.442695
          %v1700 = vpow.pop %v1699
          %v1701 = vmul.f32 %v1678, 1.442695
          %v1702 = vpow.pop %v1701
          %v1703 = vmul.f32 %v1679, 1.442695
          %v1704 = vpow.pop %v1703
          %v1705 = vmul.f32 %v1680, 1.442695
          %v1706 = vpow.pop %v1705
          %v1707 = vmul.f32 %v1681, 1.442695
          %v1708 = vpow.pop %v1707
          %v1709 = vmul.f32 %v1682, 1.442695
          %v1710 = vpow.pop %v1709
          %v1711 = vmul.f32 %v1683, 1.442695
          %v1712 = vpow.pop %v1711
          %v1713 = vmul.f32 %v1684, 1.442695
          %v1714 = vpow.pop %v1713
          %v1715 = vmul.f32 %v1685, 1.442695
          %v1716 = vpow.pop %v1715
          %v1717 = vmul.f32 %v1686, 1.442695
          %v1718 = vpow.pop %v1717
          %v1719 = vadd.f32 %v1688, %v1690
          %1720 = vadd.xlane.f32.xlu0 %v1719
          %v1721 = vpop.xlane.xlu0 %1720
          %v1722 = vadd.f32 %v1692, %v1694
          %1723 = vadd.xlane.f32.xlu0 %v1722
          %v1724 = vpop.xlane.xlu0 %1723
          %v1725 = vadd.f32 %v1696, %v1698
          %1726 = vadd.xlane.f32.xlu0 %v1725
          %v1727 = vpop.xlane.xlu0 %1726
          %v1728 = vadd.f32 %v1700, %v1702
          %1729 = vadd.xlane.f32.xlu0 %v1728
          %v1730 = vpop.xlane.xlu0 %1729
          %v1731 = vadd.f32 %v1704, %v1706
          %1732 = vadd.xlane.f32.xlu0 %v1731
          %v1733 = vpop.xlane.xlu0 %1732
          %v1734 = vadd.f32 %v1708, %v1710
          %1735 = vadd.xlane.f32.xlu0 %v1734
          %v1736 = vpop.xlane.xlu0 %1735
          %v1737 = vadd.f32 %v1712, %v1714
          %1738 = vadd.xlane.f32.xlu0 %v1737
          %v1739 = vpop.xlane.xlu0 %1738
          %v1740 = vadd.f32 %v1716, %v1718
          %1741 = vadd.xlane.f32.xlu0 %v1740
          %v1742 = vpop.xlane.xlu0 %1741
          %v1743 = vrcp.pop %v1721
          %v1744 = vmul.f32 %v1721, %v1743
          %v1745 = vsub.f32 1.0, %v1744
          %v1746 = vmul.f32 %v1743, %v1745
          %v1747 = vadd.f32 %v1743, %v1746
          %vm1748 = vweird.f32 %v1721
          %vm1749 = vweird.f32 %v1743
          %vm1750 = vmor %vm1748, %vm1749
          %v1751 = vsel %vm1750, %v1743, %v1747
          %v1752 = vand.u32 2147483647, %v1721
          %vm1753 = vcmp.eq.f32.partialorder %v1752, 8.507059e+37
          %v1754 = vand.u32 %v1721, 2147483648
          %v1755 = vor.u32 1.1754944e-38, %v1754
          %v1756 = vsel %vm1753, %v1755, %v1751
          %v1757 = vrcp.pop %v1724
          %v1758 = vmul.f32 %v1724, %v1757
          %v1759 = vsub.f32 1.0, %v1758
          %v1760 = vmul.f32 %v1757, %v1759
          %v1761 = vadd.f32 %v1757, %v1760
          %vm1762 = vweird.f32 %v1724
          %vm1763 = vweird.f32 %v1757
          %vm1764 = vmor %vm1762, %vm1763
          %v1765 = vsel %vm1764, %v1757, %v1761
          %v1766 = vand.u32 2147483647, %v1724
          %vm1767 = vcmp.eq.f32.partialorder %v1766, 8.507059e+37
          %v1768 = vand.u32 %v1724, 2147483648
          %v1769 = vor.u32 1.1754944e-38, %v1768
          %v1770 = vsel %vm1767, %v1769, %v1765
          %v1771 = vrcp.pop %v1727
          %v1772 = vmul.f32 %v1727, %v1771
          %v1773 = vsub.f32 1.0, %v1772
          %v1774 = vmul.f32 %v1771, %v1773
          %v1775 = vadd.f32 %v1771, %v1774
          %vm1776 = vweird.f32 %v1727
          %vm1777 = vweird.f32 %v1771
          %vm1778 = vmor %vm1776, %vm1777
          %v1779 = vsel %vm1778, %v1771, %v1775
          %v1780 = vand.u32 2147483647, %v1727
          %vm1781 = vcmp.eq.f32.partialorder %v1780, 8.507059e+37
          %v1782 = vand.u32 %v1727, 2147483648
          %v1783 = vor.u32 1.1754944e-38, %v1782
          %v1784 = vsel %vm1781, %v1783, %v1779
          %v1785 = vrcp.pop %v1730
          %v1786 = vmul.f32 %v1730, %v1785
          %v1787 = vsub.f32 1.0, %v1786
          %v1788 = vmul.f32 %v1785, %v1787
          %v1789 = vadd.f32 %v1785, %v1788
          %vm1790 = vweird.f32 %v1730
          %vm1791 = vweird.f32 %v1785
          %vm1792 = vmor %vm1790, %vm1791
          %v1793 = vsel %vm1792, %v1785, %v1789
          %v1794 = vand.u32 2147483647, %v1730
          %vm1795 = vcmp.eq.f32.partialorder %v1794, 8.507059e+37
          %v1796 = vand.u32 %v1730, 2147483648
          %v1797 = vor.u32 1.1754944e-38, %v1796
          %v1798 = vsel %vm1795, %v1797, %v1793
          %v1799 = vrcp.pop %v1733
          %v1800 = vmul.f32 %v1733, %v1799
          %v1801 = vsub.f32 1.0, %v1800
          %v1802 = vmul.f32 %v1799, %v1801
          %v1803 = vadd.f32 %v1799, %v1802
          %vm1804 = vweird.f32 %v1733
          %vm1805 = vweird.f32 %v1799
          %vm1806 = vmor %vm1804, %vm1805
          %v1807 = vsel %vm1806, %v1799, %v1803
          %v1808 = vand.u32 2147483647, %v1733
          %vm1809 = vcmp.eq.f32.partialorder %v1808, 8.507059e+37
          %v1810 = vand.u32 %v1733, 2147483648
          %v1811 = vor.u32 1.1754944e-38, %v1810
          %v1812 = vsel %vm1809, %v1811, %v1807
          %v1813 = vrcp.pop %v1736
          %v1814 = vmul.f32 %v1736, %v1813
          %v1815 = vsub.f32 1.0, %v1814
          %v1816 = vmul.f32 %v1813, %v1815
          %v1817 = vadd.f32 %v1813, %v1816
          %vm1818 = vweird.f32 %v1736
          %vm1819 = vweird.f32 %v1813
          %vm1820 = vmor %vm1818, %vm1819
          %v1821 = vsel %vm1820, %v1813, %v1817
          %v1822 = vand.u32 2147483647, %v1736
          %vm1823 = vcmp.eq.f32.partialorder %v1822, 8.507059e+37
          %v1824 = vand.u32 %v1736, 2147483648
          %v1825 = vor.u32 1.1754944e-38, %v1824
          %v1826 = vsel %vm1823, %v1825, %v1821
          %v1827 = vrcp.pop %v1739
          %v1828 = vmul.f32 %v1739, %v1827
          %v1829 = vsub.f32 1.0, %v1828
          %v1830 = vmul.f32 %v1827, %v1829
          %v1831 = vadd.f32 %v1827, %v1830
          %vm1832 = vweird.f32 %v1739
          %vm1833 = vweird.f32 %v1827
          %vm1834 = vmor %vm1832, %vm1833
          %v1835 = vsel %vm1834, %v1827, %v1831
          %v1836 = vand.u32 2147483647, %v1739
          %vm1837 = vcmp.eq.f32.partialorder %v1836, 8.507059e+37
          %v1838 = vand.u32 %v1739, 2147483648
          %v1839 = vor.u32 1.1754944e-38, %v1838
          %v1840 = vsel %vm1837, %v1839, %v1835
          %v1841 = vrcp.pop %v1742
          %v1842 = vmul.f32 %v1742, %v1841
          %v1843 = vsub.f32 1.0, %v1842
          %v1844 = vmul.f32 %v1841, %v1843
          %v1845 = vadd.f32 %v1841, %v1844
          %vm1846 = vweird.f32 %v1742
          %vm1847 = vweird.f32 %v1841
          %vm1848 = vmor %vm1846, %vm1847
          %v1849 = vsel %vm1848, %v1841, %v1845
          %v1850 = vand.u32 2147483647, %v1742
          %vm1851 = vcmp.eq.f32.partialorder %v1850, 8.507059e+37
          %v1852 = vand.u32 %v1742, 2147483648
          %v1853 = vor.u32 1.1754944e-38, %v1852
          %v1854 = vsel %vm1851, %v1853, %v1849
          %v1855 = vmul.f32 %v1688, %v1756
          %v1856 = vmul.f32 %v1690, %v1756
          %v1857 = vmul.f32 %v1692, %v1770
          %v1858 = vmul.f32 %v1694, %v1770
          %v1859 = vmul.f32 %v1696, %v1784
          %v1860 = vmul.f32 %v1698, %v1784
          %v1861 = vmul.f32 %v1700, %v1798
          %v1862 = vmul.f32 %v1702, %v1798
          %v1863 = vmul.f32 %v1704, %v1812
          %v1864 = vmul.f32 %v1706, %v1812
          %v1865 = vmul.f32 %v1708, %v1826
          %v1866 = vmul.f32 %v1710, %v1826
          %v1867 = vmul.f32 %v1712, %v1840
          %v1868 = vmul.f32 %v1714, %v1840
          %v1869 = vmul.f32 %v1716, %v1854
          %v1870 = vmul.f32 %v1718, %v1854
          %v1871 = vld [vmem:[#allocation3] sm:$0x3]
          %v1873 = vperm.slane %v1871, 0
          %v1874 = vperm.slane %v1871, 1
          %v1877 = vsub.f32 %v906, %v1873
          %v1878 = vsub.f32 %v1464, %v1874
          %v1879 = vsub.f32 %v910, %v1873
          %v1880 = vsub.f32 %v1468, %v1874
          %v1881 = vsub.f32 %v914, %v1873
          %v1882 = vsub.f32 %v1472, %v1874
          %v1883 = vsub.f32 %v918, %v1873
          %v1884 = vsub.f32 %v1476, %v1874
          %v1885 = vsub.f32 %v922, %v1873
          %v1886 = vsub.f32 %v1480, %v1874
          %v1887 = vsub.f32 %v926, %v1873
          %v1888 = vsub.f32 %v1484, %v1874
          %v1889 = vsub.f32 %v930, %v1873
          %v1890 = vsub.f32 %v1488, %v1874
          %v1891 = vsub.f32 %v934, %v1873
          %v1892 = vsub.f32 %v1492, %v1874
          %v1893 = vmul.f32 %v1877, 1.442695
          %v1894 = vpow.pop %v1893
          %v1895 = vmul.f32 %v1878, 1.442695
          %v1896 = vpow.pop %v1895
          %v1897 = vmul.f32 %v1879, 1.442695
          %v1898 = vpow.pop %v1897
          %v1899 = vmul.f32 %v1880, 1.442695
          %v1900 = vpow.pop %v1899
          %v1901 = vmul.f32 %v1881, 1.442695
          %v1902 = vpow.pop %v1901
          %v1903 = vmul.f32 %v1882, 1.442695
          %v1904 = vpow.pop %v1903
          %v1905 = vmul.f32 %v1883, 1.442695
          %v1906 = vpow.pop %v1905
          %v1907 = vmul.f32 %v1884, 1.442695
          %v1908 = vpow.pop %v1907
          %v1909 = vmul.f32 %v1885, 1.442695
          %v1910 = vpow.pop %v1909
          %v1911 = vmul.f32 %v1886, 1.442695
          %v1912 = vpow.pop %v1911
          %v1913 = vmul.f32 %v1887, 1.442695
          %v1914 = vpow.pop %v1913
          %v1915 = vmul.f32 %v1888, 1.442695
          %v1916 = vpow.pop %v1915
          %v1917 = vmul.f32 %v1889, 1.442695
          %v1918 = vpow.pop %v1917
          %v1919 = vmul.f32 %v1890, 1.442695
          %v1920 = vpow.pop %v1919
          %v1921 = vmul.f32 %v1891, 1.442695
          %v1922 = vpow.pop %v1921
          %v1923 = vmul.f32 %v1892, 1.442695
          %v1924 = vpow.pop %v1923
          %v1925 = vld [vmem:[#allocation4] sm:$0x3]
          %v1926 = vrcp.pop %v1925
          %v1927 = vmul.f32 %v1925, %v1926
          %v1928 = vsub.f32 1.0, %v1927
          %v1929 = vmul.f32 %v1926, %v1928
          %v1930 = vadd.f32 %v1926, %v1929
          %vm1931 = vweird.f32 %v1925
          %vm1932 = vweird.f32 %v1926
          %vm1933 = vmor %vm1931, %vm1932
          %v1934 = vsel %vm1933, %v1926, %v1930
          %v1935 = vand.u32 2147483647, %v1925
          %vm1936 = vcmp.eq.f32.partialorder %v1935, 8.507059e+37
          %v1937 = vand.u32 %v1925, 2147483648
          %v1938 = vor.u32 1.1754944e-38, %v1937
          %v1939 = vsel %vm1936, %v1938, %v1934
          %v1941 = vperm.slane %v1939, 0
          %v1942 = vperm.slane %v1939, 1
          %v1945 = vmul.f32 %v1894, %v1941
          %v1946 = vmul.f32 %v1896, %v1942
          %v1947 = vmul.f32 %v1898, %v1941
          %v1948 = vmul.f32 %v1900, %v1942
          %v1949 = vmul.f32 %v1902, %v1941
          %v1950 = vmul.f32 %v1904, %v1942
          %v1951 = vmul.f32 %v1906, %v1941
          %v1952 = vmul.f32 %v1908, %v1942
          %v1953 = vmul.f32 %v1910, %v1941
          %v1954 = vmul.f32 %v1912, %v1942
          %v1955 = vmul.f32 %v1914, %v1941
          %v1956 = vmul.f32 %v1916, %v1942
          %v1957 = vmul.f32 %v1918, %v1941
          %v1958 = vmul.f32 %v1920, %v1942
          %v1959 = vmul.f32 %v1922, %v1941
          %v1960 = vmul.f32 %v1924, %v1942
          %v1961 = vld [vmem:[#allocation2] sm:$0x1]
          %v1962 = vsub.f32 0.0, %v1631
          %v1963 = vsub.f32 0.0, %v1632
          %v1964 = vsub.f32 0.0, %v1633
          %v1965 = vsub.f32 0.0, %v1634
          %v1966 = vsub.f32 0.0, %v1635
          %v1967 = vsub.f32 0.0, %v1636
          %v1968 = vsub.f32 0.0, %v1637
          %v1969 = vsub.f32 0.0, %v1638
          %v1970 = vsub.f32 0.0, %v1639
          %v1971 = vsub.f32 0.0, %v1640
          %v1972 = vsub.f32 0.0, %v1641
          %v1973 = vsub.f32 0.0, %v1642
          %v1974 = vsub.f32 0.0, %v1643
          %v1975 = vsub.f32 0.0, %v1644
          %v1976 = vsub.f32 0.0, %v1645
          %v1977 = vsub.f32 0.0, %v1646
          %v1978 = vadd.f32 %v1855, 0.0001
          %v1979 = vadd.f32 %v1856, 0.0001
          %v1980 = vadd.f32 %v1857, 0.0001
          %v1981 = vadd.f32 %v1858, 0.0001
          %v1982 = vadd.f32 %v1859, 0.0001
          %v1983 = vadd.f32 %v1860, 0.0001
          %v1984 = vadd.f32 %v1861, 0.0001
          %v1985 = vadd.f32 %v1862, 0.0001
          %v1986 = vadd.f32 %v1863, 0.0001
          %v1987 = vadd.f32 %v1864, 0.0001
          %v1988 = vadd.f32 %v1865, 0.0001
          %v1989 = vadd.f32 %v1866, 0.0001
          %v1990 = vadd.f32 %v1867, 0.0001
          %v1991 = vadd.f32 %v1868, 0.0001
          %v1992 = vadd.f32 %v1869, 0.0001
          %v1993 = vadd.f32 %v1870, 0.0001
          %v1994 = vlog2.pop %v1978
          %v1995 = vmul.f32 %v1994, 0.6931472
          %v1996 = vlog2.pop %v1979
          %v1997 = vmul.f32 %v1996, 0.6931472
          %v1998 = vlog2.pop %v1980
          %v1999 = vmul.f32 %v1998, 0.6931472
          %v2000 = vlog2.pop %v1981
          %v2001 = vmul.f32 %v2000, 0.6931472
          %v2002 = vlog2.pop %v1982
          %v2003 = vmul.f32 %v2002, 0.6931472
          %v2004 = vlog2.pop %v1983
          %v2005 = vmul.f32 %v2004, 0.6931472
          %v2006 = vlog2.pop %v1984
          %v2007 = vmul.f32 %v2006, 0.6931472
          %v2008 = vlog2.pop %v1985
          %v2009 = vmul.f32 %v2008, 0.6931472
          %v2010 = vlog2.pop %v1986
          %v2011 = vmul.f32 %v2010, 0.6931472
          %v2012 = vlog2.pop %v1987
          %v2013 = vmul.f32 %v2012, 0.6931472
          %v2014 = vlog2.pop %v1988
          %v2015 = vmul.f32 %v2014, 0.6931472
          %v2016 = vlog2.pop %v1989
          %v2017 = vmul.f32 %v2016, 0.6931472
          %v2018 = vlog2.pop %v1990
          %v2019 = vmul.f32 %v2018, 0.6931472
          %v2020 = vlog2.pop %v1991
          %v2021 = vmul.f32 %v2020, 0.6931472
          %v2022 = vlog2.pop %v1992
          %v2023 = vmul.f32 %v2022, 0.6931472
          %v2024 = vlog2.pop %v1993
          %v2025 = vmul.f32 %v2024, 0.6931472
          %v2026 = vadd.f32 %v1945, 0.0001
          %v2027 = vadd.f32 %v1946, 0.0001
          %v2028 = vadd.f32 %v1947, 0.0001
          %v2029 = vadd.f32 %v1948, 0.0001
          %v2030 = vadd.f32 %v1949, 0.0001
          %v2031 = vadd.f32 %v1950, 0.0001
          %v2032 = vadd.f32 %v1951, 0.0001
          %v2033 = vadd.f32 %v1952, 0.0001
          %v2034 = vadd.f32 %v1953, 0.0001
          %v2035 = vadd.f32 %v1954, 0.0001
          %v2036 = vadd.f32 %v1955, 0.0001
          %v2037 = vadd.f32 %v1956, 0.0001
          %v2038 = vadd.f32 %v1957, 0.0001
          %v2039 = vadd.f32 %v1958, 0.0001
          %v2040 = vadd.f32 %v1959, 0.0001
          %v2041 = vadd.f32 %v1960, 0.0001
          %v2042 = vlog2.pop %v2026
          %v2043 = vmul.f32 %v2042, 0.6931472
          %v2044 = vlog2.pop %v2027
          %v2045 = vmul.f32 %v2044, 0.6931472
          %v2046 = vlog2.pop %v2028
          %v2047 = vmul.f32 %v2046, 0.6931472
          %v2048 = vlog2.pop %v2029
          %v2049 = vmul.f32 %v2048, 0.6931472
          %v2050 = vlog2.pop %v2030
          %v2051 = vmul.f32 %v2050, 0.6931472
          %v2052 = vlog2.pop %v2031
          %v2053 = vmul.f32 %v2052, 0.6931472
          %v2054 = vlog2.pop %v2032
          %v2055 = vmul.f32 %v2054, 0.6931472
          %v2056 = vlog2.pop %v2033
          %v2057 = vmul.f32 %v2056, 0.6931472
          %v2058 = vlog2.pop %v2034
          %v2059 = vmul.f32 %v2058, 0.6931472
          %v2060 = vlog2.pop %v2035
          %v2061 = vmul.f32 %v2060, 0.6931472
          %v2062 = vlog2.pop %v2036
          %v2063 = vmul.f32 %v2062, 0.6931472
          %v2064 = vlog2.pop %v2037
          %v2065 = vmul.f32 %v2064, 0.6931472
          %v2066 = vlog2.pop %v2038
          %v2067 = vmul.f32 %v2066, 0.6931472
          %v2068 = vlog2.pop %v2039
          %v2069 = vmul.f32 %v2068, 0.6931472
          %v2070 = vlog2.pop %v2040
          %v2071 = vmul.f32 %v2070, 0.6931472
          %v2072 = vlog2.pop %v2041
          %v2073 = vmul.f32 %v2072, 0.6931472
          %v2074 = vadd.f32 %v1995, %v2043
          %v2075 = vadd.f32 %v1997, %v2045
          %v2076 = vadd.f32 %v1999, %v2047
          %v2077 = vadd.f32 %v2001, %v2049
          %v2078 = vadd.f32 %v2003, %v2051
          %v2079 = vadd.f32 %v2005, %v2053
          %v2080 = vadd.f32 %v2007, %v2055
          %v2081 = vadd.f32 %v2009, %v2057
          %v2082 = vadd.f32 %v2011, %v2059
          %v2083 = vadd.f32 %v2013, %v2061
          %v2084 = vadd.f32 %v2015, %v2063
          %v2085 = vadd.f32 %v2017, %v2065
          %v2086 = vadd.f32 %v2019, %v2067
          %v2087 = vadd.f32 %v2021, %v2069
          %v2088 = vadd.f32 %v2023, %v2071
          %v2089 = vadd.f32 %v2025, %v2073
          %v2090 = vmul.f32 %v1962, %v2074
          %v2091 = vmul.f32 %v1963, %v2075
          %v2092 = vmul.f32 %v1964, %v2076
          %v2093 = vmul.f32 %v1965, %v2077
          %v2094 = vmul.f32 %v1966, %v2078
          %v2095 = vmul.f32 %v1967, %v2079
          %v2096 = vmul.f32 %v1968, %v2080
          %v2097 = vmul.f32 %v1969, %v2081
          %v2098 = vmul.f32 %v1970, %v2082
          %v2099 = vmul.f32 %v1971, %v2083
          %v2100 = vmul.f32 %v1972, %v2084
          %v2101 = vmul.f32 %v1973, %v2085
          %v2102 = vmul.f32 %v1974, %v2086
          %v2103 = vmul.f32 %v1975, %v2087
          %v2104 = vmul.f32 %v1976, %v2088
          %v2105 = vmul.f32 %v1977, %v2089
          %v2106 = vadd.f32 %v2090, %v2091
          %v2107 = vadd.f32 %v2106, %v2092
          %v2108 = vadd.f32 %v2107, %v2093
          %v2109 = vadd.f32 %v2108, %v2094
          %v2110 = vadd.f32 %v2109, %v2095
          %v2111 = vadd.f32 %v2110, %v2096
          %v2112 = vadd.f32 %v2111, %v2097
          %v2113 = vadd.f32 %v2112, %v2098
          %v2114 = vadd.f32 %v2113, %v2099
          %v2115 = vadd.f32 %v2114, %v2100
          %v2116 = vadd.f32 %v2115, %v2101
          %v2117 = vadd.f32 %v2116, %v2102
          %v2118 = vadd.f32 %v2117, %v2103
          %v2119 = vadd.f32 %v2118, %v2104
          %v2120 = vadd.f32 %v2119, %v2105
          %2121 = vadd.xlane.f32.xlu0 %v2120
          %v2122 = vpop.xlane.xlu0 %2121
          %v2123 = vrot.slane %v2122, 4
          %v2124 = vadd.f32 %v2122, %v2123
          %v2125 = vrot.slane %v2124, 2
          %v2126 = vadd.f32 %v2124, %v2125
          %v2127 = vrot.slane %v2126, 1
          %v2128 = vadd.f32 %v2126, %v2127
          %s2129 = vtos %v2128
          %v2130 = vstv %s2129
          %v2131 = vadd.f32 %v1961, %v2130
          %vm2132 = vcmask 0
          %2133 = vst.msk [vmem:[#allocation2] sm:$0x1] %vm2132, %v2131
        $region44: #{tpu_custom_call.1} parent=31 // pred_fallthru
          _
        %p2134 = scmp.eq.s32.totalorder %s20, 3
        %p2135 = pnand %p1627, %p2134
        %p2136 = pneg %p2135
        // Predicated region
        $region45: #{tpu_custom_call.1} parent=31 // pred_check
          _
        $region46: #{tpu_custom_call.1} parent=31 // pred_check_branch
          %2138 = sbr.rel (%p2135) target = $region48
        $region47: #{tpu_custom_call.1} parent=31 // pred_region
          %v2139 = vld [vmem:[#allocation2] sm:$0x1]
          %vm2140 = vcmask 0
          %2141 = vst.msk [vmem:[#allocation5] sm:$0x1] %vm2140, %v2139
        $region48: #{tpu_custom_call.1} parent=31 // pred_fallthru
          _
        // Predicated region
        $region49: #{tpu_custom_call.1} parent=31 // pred_check
          %p2142 = pneg %p115
        $region50: #{tpu_custom_call.1} parent=31 // pred_check_branch
          %2144 = sbr.rel (%p2142) target = $region52
        $region51: #{tpu_custom_call.1} parent=31 // pred_region
          %2146 = vsyncadd [#allocation6], 0
          %s2148 = sshll.u32 [#allocation5], 4
          %s2149 = int_to_ptr.vmem [resolvable:$true] %s2148
          %s2150 = sshll.u32 %s3, 4
          %s2151 = int_to_ptr.hbm [resolvable:$true] %s2150
          %2153 = dma.vmem_to_hbm [thread:$0]  %s2149, 16, %s2151, [#allocation6]
        $region52: #{tpu_custom_call.1} parent=31 // pred_fallthru
          _
        // Predicated region
        $region53: #{tpu_custom_call.1} parent=31 // pred_check
          %p2154 = pneg %p115
        $region54: #{tpu_custom_call.1} parent=31 // pred_check_branch
          %2156 = sbr.rel (%p2154) target = $region56
        $region55: #{tpu_custom_call.1} parent=31 // pred_region
          %2158 = dma.done [#allocation6], 16
        $region56: #{tpu_custom_call.1} parent=31 // pred_fallthru
          _
      $region32: #{tpu_custom_call.1} parent=5 // pred_fallthru
        _
      %p2159 = scmp.le.s32.totalorder 2, %s10
      // Predicated region
      $region57: #{tpu_custom_call.1} parent=5 // pred_check
        %p2160 = pneg %p2159
      $region58: #{tpu_custom_call.1} parent=5 // pred_check_branch
        %2162 = sbr.rel (%p2160) target = $region60
      $region59: #{tpu_custom_call.1} parent=5 // pred_region
        %s2163 = ssub.s32 %s10, 2
      $region60: #{tpu_custom_call.1} parent=5 // pred_fallthru
        _
    $region6: #{tpu_custom_call.1} parent=1 // loop_footer
      %s14 = sadd.s32 1, %s10
    $region7: #{tpu_custom_call.1} parent=1 // loop_footer_branch
      %9 = sbr.rel target = $region3
    $region8: #{tpu_custom_call.1} parent=1 // loop_exit
      _
    %2164 = vsyncpa [#allocation6], 1
    %s2165 = scalar_lea.sflag [#allocation6], 1
    %2166 = vsyncpa %s2165, 1

</llo_original>
